<compile_context>
chip_gen: v7x
topology: tpu7x:2x2x1
jax: 0.10.0
libtpu: 0.0.40
codegen_flags: <defaults>
</compile_context>

<pallas_src>
import functools

import jax
import jax.numpy as jnp
from jax import lax
from jax.experimental import pallas as pl
from jax.experimental.pallas import tpu as pltpu


def _self_attn_kernel(gamma_ref, x_ref, mx_ref, v_ref, colk_ref,
                      out_ref, attn_ref, *, approx_recip):
    cd = mx_ref.dtype                                  # MXU operand dtype
    gamma = gamma_ref[0]                               # scalar from SMEM

    x_q_f32 = x_ref[...].astype(jnp.float32)           # (C, tq) residual path
    x_q = x_q_f32.astype(cd)

    # energy[i, j] = x_i^T (Wq^T Wk) x_j + (Wk^T bq).x_j   (+ -1e30 on pad keys)
    # Row-constant terms (Wq^T bk).x_i and bq.bk are dropped: softmax over the
    # key axis is invariant to them, so attention/output are unchanged.
    energy = lax.dot_general(x_q, mx_ref[...],
                             dimension_numbers=(((0,), (0,)), ((), ())),
                             preferred_element_type=jnp.float32)   # (tq, Np)
    energy = energy + colk_ref[...]                     # (1, Np) broadcast add

    # Exact f32 softmax over keys (max-subtracted).  approx reciprocal on the
    # bf16 fast path means rows sum to 1 only within ~1e-3 (documented).
    e_max = jnp.max(energy, axis=-1, keepdims=True)
    p = jnp.exp(energy - e_max)
    denom = jnp.sum(p, axis=-1, keepdims=True)
    attn_f32 = p * pl.reciprocal(denom, approx=approx_recip)       # (tq, Np)

    # Narrow the (tq, Np) slab ONCE; reuse it for both the store and the matmul.
    attn_store = attn_f32.astype(attn_ref.dtype)
    attn_ref[...] = attn_store
    attn_mm = attn_store if attn_store.dtype == cd else attn_store.astype(cd)

    # out[c, i] = sum_j V[c, j] * attn[i, j]
    # NOTE: contraction on the minor dim of both operands — Mosaic handles the
    # transposed-RHS feed; if profiling ever shows a slab XLU transpose here,
    # switch V to (Np, C) layout and transpose only the (tq, C) result.
    out_ct = lax.dot_general(v_ref[...], attn_mm,
                             dimension_numbers=(((1,), (1,)), ((), ())),
                             preferred_element_type=jnp.float32)   # (C, tq)

    out_ref[...] = (gamma * out_ct + x_q_f32).astype(out_ref.dtype)


def _vmem_cap_bytes():
    """Generation-aware scoped-VMEM ceiling (~78% of per-core physical VMEM)."""
    phys = 128 * 1024 * 1024                 # v5e / v6e default
    try:
        phys = int(pltpu.get_tpu_info().vmem_capacity_bytes)
    except Exception:
        pass
    return max(int(0.78 * phys), 32 * 1024 * 1024)


def _vmem_estimate(C, Np, tq, mxu_isz, attn_isz):
    """Rough per-step resident VMEM: double-buffered blocks + slab temporaries."""
    f32 = 4
    est = 0
    est += 2 * C * tq * f32            # x query tile
    est += 2 * C * Np * mxu_isz        # M @ x  (constant within a batch)
    est += 2 * C * Np * mxu_isz        # V
    est += 2 * 8 * Np * f32            # per-key bias / mask row
    est += 2 * C * tq * f32            # output tile
    est += 2 * tq * Np * attn_isz      # attention slab writeback
    est += 4 * tq * Np * f32           # energy / exp temporaries
    est += 2 * tq * Np * mxu_isz       # narrowed attention operand
    return est


def _pick_query_tile(Np, C, mxu_isz, attn_isz, vmem_cap, query_tile=None):
    if query_tile is not None:
        assert Np % query_tile == 0, "query_tile must divide the padded N"
        return query_tile
    # Prefer tq=256 (halves per-step overhead, larger MXU tiles on v5e/v6e);
    # fall back to 128 when 256 does not divide Np or the budget is tight (v7x).
    for tq in (256, 128):
        if Np % tq == 0 and 2 * _vmem_estimate(C, Np, tq, mxu_isz, attn_isz) <= vmem_cap:
            return tq
    return 128


def self_attn_pallas(x, params, *, mxu_dtype=jnp.bfloat16,
                     attn_dtype=jnp.bfloat16, query_tile=None):
    """x: (B, C, W, H). Returns (out (B,C,W,H) in x.dtype, attention (B,N,N))."""
    B, C, W, H = x.shape
    N = W * H
    Np = ((N + 127) // 128) * 128            # pad keys/queries to a lane multiple

    f32 = jnp.float32
    hi = lax.Precision.HIGHEST
    xf = x.reshape(B, C, N).astype(f32)
    if Np != N:
        xf = jnp.pad(xf, ((0, 0), (0, 0), (0, Np - N)))

    wq = params["wq"].astype(f32)            # (Cq, C)
    bq = params["bq"].astype(f32)            # (Cq, 1)
    wk = params["wk"].astype(f32)            # (Cq, C)
    wv = params["wv"].astype(f32)            # (C, C)
    bv = params["bv"].astype(f32)            # (C, 1)
    gamma = params["gamma"].reshape((1,)).astype(f32)

    # Fused q/k projections:  q_i.k_j = x_i^T (Wq^T Wk) x_j + (Wk^T bq).x_j
    #                                   + row-constant terms (dropped).
    m_mat = jnp.dot(wq.T, wk, precision=hi)                        # (C, C)
    w_vec = jnp.dot(wk.T, bq, precision=hi)                        # (C, 1)

    # K-side precompute hoisted out of the kernel: O(C^2 N) per batch via XLA.
    mx = jnp.einsum('cd,bdn->bcn', m_mat, xf, precision=hi).astype(mxu_dtype)
    v = (jnp.einsum('cd,bdn->bcn', wv, xf, precision=hi)
         + bv[None]).astype(mxu_dtype)                             # (B, C, Np)
    colk = jnp.einsum('cz,bcn->bzn', w_vec, xf, precision=hi)      # (B, 1, Np)
    # Mask padded key positions with a large negative bias (exp underflows to 0).
    colk = jnp.where(jnp.arange(Np)[None, None, :] < N, colk,
                     jnp.float32(-1e30)).astype(f32)

    mxu_isz = jnp.dtype(mxu_dtype).itemsize
    attn_isz = jnp.dtype(attn_dtype).itemsize
    cap = _vmem_cap_bytes()
    tq = _pick_query_tile(Np, C, mxu_isz, attn_isz, cap, query_tile)
    est = _vmem_estimate(C, Np, tq, mxu_isz, attn_isz)
    vmem_limit = int(min(cap, max(int(1.5 * est), 32 * 1024 * 1024)))

    kernel = functools.partial(
        _self_attn_kernel,
        approx_recip=(jnp.dtype(mxu_dtype) != jnp.dtype(jnp.float32)))

    out_flat, attn = pl.pallas_call(
        kernel,
        grid=(B, Np // tq),
        in_specs=[
            pl.BlockSpec(memory_space=pltpu.MemorySpace.SMEM),        # gamma
            pl.BlockSpec((None, C, tq), lambda b, q: (b, 0, q)),      # x tile
            pl.BlockSpec((None, C, Np), lambda b, q: (b, 0, 0)),      # M @ x
            pl.BlockSpec((None, C, Np), lambda b, q: (b, 0, 0)),      # V
            pl.BlockSpec((None, 1, Np), lambda b, q: (b, 0, 0)),      # key bias
        ],
        out_specs=[
            pl.BlockSpec((None, C, tq), lambda b, q: (b, 0, q)),      # out tile
            pl.BlockSpec((None, tq, Np), lambda b, q: (b, q, 0)),     # attn slab
        ],
        out_shape=[
            jax.ShapeDtypeStruct((B, C, Np), x.dtype),
            jax.ShapeDtypeStruct((B, Np, Np), attn_dtype),
        ],
        compiler_params=pltpu.CompilerParams(
            # Fully independent grid points: both axes parallel (megacore /
            # v7x dual-TC splitting even when B == 1).
            dimension_semantics=("parallel", "parallel"),
            vmem_limit_bytes=vmem_limit,
        ),
    )(gamma, xf, mx, v, colk)

    out = out_flat[:, :, :N].reshape(B, C, W, H)
    return out, attn[:, :N, :N]


def self_attn_reference(x, params):
    """Pure-JAX reference matching the PyTorch forward (unfused projections)."""
    B, C, W, H = x.shape
    N = W * H
    xf = x.reshape(B, C, N).astype(jnp.float32)
    q = jnp.einsum("oc,bcn->bon", params["wq"], xf) + params["bq"][None]
    k = jnp.einsum("oc,bcn->bon", params["wk"], xf) + params["bk"][None]
    v = jnp.einsum("oc,bcn->bon", params["wv"], xf) + params["bv"][None]
    energy = jnp.einsum("bci,bcj->bij", q, k)
    attn = jax.nn.softmax(energy, axis=-1)
    out = jnp.einsum("bcj,bij->bci", v, attn)
    out = params["gamma"][0, 0] * out + xf
    return out.reshape(B, C, W, H), attn


def make_params(key, in_dim, gamma_value=0.0):
    """Synthetic parameters with the module's shapes.
    Conv2d 1x1 kernels (out,in,1,1) are stored squeezed as (out,in)."""
    cq = in_dim // 8
    k1, k2, k3, k4, k5, k6 = jax.random.split(key, 6)
    scale = 0.1
    return {
        "wq": scale * jax.random.normal(k1, (cq, in_dim), jnp.float32),
        "bq": scale * jax.random.normal(k2, (cq, 1), jnp.float32),
        "wk": scale * jax.random.normal(k3, (cq, in_dim), jnp.float32),
        "bk": scale * jax.random.normal(k4, (cq, 1), jnp.float32),
        "wv": scale * jax.random.normal(k5, (in_dim, in_dim), jnp.float32),
        "bv": scale * jax.random.normal(k6, (in_dim, 1), jnp.float32),
        # gamma is nn.Parameter(torch.zeros(1)) at init; stored as (1,1).
        "gamma": jnp.full((1, 1), gamma_value, jnp.float32),
    }


if __name__ == "__main__":
    B, C, W, H = 2, 16, 16, 16               # N = 256
    key = jax.random.PRNGKey(0)
    kx, kp = jax.random.split(key)
    x = jax.random.normal(kx, (B, C, W, H), jnp.float32)

    # Faithful init: gamma = 0 -> output must equal the input.
    params0 = make_params(kp, C, gamma_value=0.0)
    out0, attn0 = self_attn_pallas(x, params0, mxu_dtype=jnp.float32,
                                   attn_dtype=jnp.float32)
    jax.block_until_ready((out0, attn0))
    assert jnp.allclose(out0, x, atol=1e-5), "gamma=0 must return the input"

    params1 = make_params(kp, C, gamma_value=0.75)
    out_r, attn_r = self_attn_reference(x, params1)

    # Strict f32 path vs the unfused pure-JAX reference.
    out_k, attn_k = self_attn_pallas(x, params1, mxu_dtype=jnp.float32,
                                     attn_dtype=jnp.float32)
    jax.block_until_ready((out_k, attn_k))
    assert jnp.allclose(attn_k, attn_r, rtol=1e-4, atol=1e-5)
    assert jnp.allclose(out_k, out_r, rtol=1e-4, atol=1e-5)

    # Default fast path: bf16 MXU operands (f32 accum) + bf16 attention map.
    out_b, attn_b = self_attn_pallas(x, params1)
    jax.block_until_ready((out_b, attn_b))
    assert attn_b.dtype == jnp.bfloat16
    assert jnp.allclose(attn_b.astype(jnp.float32), attn_r, rtol=5e-2, atol=5e-3)
    assert jnp.allclose(out_b, out_r, rtol=5e-2, atol=3e-2)

    # Non-lane-multiple spatial size exercises the N-padding + key-mask path.
    xp = jax.random.normal(kx, (B, C, 9, 9), jnp.float32)       # N = 81 -> 128
    out_p, attn_p = self_attn_pallas(xp, params1, mxu_dtype=jnp.float32,
                                     attn_dtype=jnp.float32)
    out_pr, attn_pr = self_attn_reference(xp, params1)
    jax.block_until_ready((out_p, attn_p))
    assert attn_p.shape == (B, 81, 81)
    assert jnp.allclose(attn_p, attn_pr, rtol=1e-4, atol=1e-5)
    assert jnp.allclose(out_p, out_pr, rtol=1e-4, atol=1e-5)

    print("KERNEL_OK")
</pallas_src>

<mosaic_0001>
module attributes {stable_mosaic.version = 11 : i64} {
  func.func @_self_attn_kernel(%arg0: i32, %arg1: i32, %arg2: memref<1xf32, #tpu.memory_space<smem>>, %arg3: memref<1x16x256xf32, #tpu.memory_space<vmem>>, %arg4: memref<1x16x256xf32, #tpu.memory_space<vmem>>, %arg5: memref<1x16x256xf32, #tpu.memory_space<vmem>>, %arg6: memref<1x1x256xf32, #tpu.memory_space<vmem>>, %arg7: memref<1x16x256xf32, #tpu.memory_space<vmem>>, %arg8: memref<1x256x256xf32, #tpu.memory_space<vmem>>) attributes {dimension_semantics = [#tpu.dimension_semantics<parallel>, #tpu.dimension_semantics<parallel>], iteration_bounds = array<i64: 2, 1>, scalar_prefetch = 0 : i64, scratch_operands = 0 : i64, tpu.core_type = #tpu.core_type<tc>, window_params = [{transform_indices = @transform_0, window_bounds = array<i64: 1>}, {transform_indices = @transform_1, window_bounds = array<i64: 1, 16, 256>}, {transform_indices = @transform_2, window_bounds = array<i64: 1, 16, 256>}, {transform_indices = @transform_3, window_bounds = array<i64: 1, 16, 256>}, {transform_indices = @transform_4, window_bounds = array<i64: 1, 1, 256>}, {transform_indices = @transform_5, window_bounds = array<i64: 1, 16, 256>}, {transform_indices = @transform_6, window_bounds = array<i64: 1, 256, 256>}]} {
    %c0 = arith.constant 0 : index
    %0 = memref.load %arg2[%c0] : memref<1xf32, #tpu.memory_space<smem>>
    %c0_0 = arith.constant 0 : index
    %c0_1 = arith.constant 0 : index
    %c0_2 = arith.constant 0 : index
    %1 = vector.load %arg3[%c0_0, %c0_1, %c0_2] : memref<1x16x256xf32, #tpu.memory_space<vmem>>, vector<1x16x256xf32>
    %2 = vector.shape_cast %1 : vector<1x16x256xf32> to vector<16x256xf32>
    %c0_3 = arith.constant 0 : index
    %c0_4 = arith.constant 0 : index
    %c0_5 = arith.constant 0 : index
    %3 = vector.load %arg4[%c0_3, %c0_4, %c0_5] : memref<1x16x256xf32, #tpu.memory_space<vmem>>, vector<1x16x256xf32>
    %4 = vector.shape_cast %3 : vector<1x16x256xf32> to vector<16x256xf32>
    %cst = arith.constant dense<0.000000e+00> : vector<256x256xf32>
    %5 = tpu.matmul %2, %4, %cst {dimension_numbers = #tpu.dot_dimension_numbers<[0], [0], [1], [1], [0, 1, 1, 1], [], []>} : vector<16x256xf32>, vector<16x256xf32>, vector<256x256xf32> -> vector<256x256xf32>
    %c0_6 = arith.constant 0 : index
    %c0_7 = arith.constant 0 : index
    %c0_8 = arith.constant 0 : index
    %6 = vector.load %arg6[%c0_6, %c0_7, %c0_8] : memref<1x1x256xf32, #tpu.memory_space<vmem>>, vector<1x1x256xf32>
    %7 = vector.shape_cast %6 : vector<1x1x256xf32> to vector<1x256xf32>
    %8 = vector.broadcast %7 : vector<1x256xf32> to vector<256x256xf32>
    %9 = arith.addf %5, %8 : vector<256x256xf32>
    %cst_9 = arith.constant dense<0xFF800000> : vector<256xf32>
    %10 = vector.multi_reduction <maximumf>, %9, %cst_9 [1] : vector<256x256xf32> to vector<256xf32>
    %11 = vector.shape_cast %10 : vector<256xf32> to vector<256x1xf32>
    %12 = vector.broadcast %11 : vector<256x1xf32> to vector<256x256xf32>
    %13 = arith.subf %9, %12 : vector<256x256xf32>
    %14 = math.exp %13 : vector<256x256xf32>
    %cst_10 = arith.constant dense<0.000000e+00> : vector<256xf32>
    %15 = vector.multi_reduction <add>, %14, %cst_10 [1] : vector<256x256xf32> to vector<256xf32>
    %16 = vector.shape_cast %15 : vector<256xf32> to vector<256x1xf32>
    %17 = tpu.reciprocal %16 : vector<256x1xf32> -> vector<256x1xf32>
    %18 = vector.broadcast %17 : vector<256x1xf32> to vector<256x256xf32>
    %19 = arith.mulf %14, %18 : vector<256x256xf32>
    %c0_11 = arith.constant 0 : index
    %c0_12 = arith.constant 0 : index
    %c0_13 = arith.constant 0 : index
    %20 = vector.load %arg8[%c0_11, %c0_12, %c0_13] : memref<1x256x256xf32, #tpu.memory_space<vmem>>, vector<1x256x256xf32>
    %21 = vector.shape_cast %20 : vector<1x256x256xf32> to vector<256x256xf32>
    %22 = vector.shape_cast %19 : vector<256x256xf32> to vector<1x256x256xf32>
    tpu.vector_store %arg8[%c0_11, %c0_12, %c0_13], %22 {strides = array<i32>} : memref<1x256x256xf32, #tpu.memory_space<vmem>>, vector<1x256x256xf32>,
    %c0_14 = arith.constant 0 : index
    %c0_15 = arith.constant 0 : index
    %c0_16 = arith.constant 0 : index
    %23 = vector.load %arg5[%c0_14, %c0_15, %c0_16] : memref<1x16x256xf32, #tpu.memory_space<vmem>>, vector<1x16x256xf32>
    %24 = vector.shape_cast %23 : vector<1x16x256xf32> to vector<16x256xf32>
    %cst_17 = arith.constant dense<0.000000e+00> : vector<16x256xf32>
    %25 = tpu.matmul %24, %19, %cst_17 {dimension_numbers = #tpu.dot_dimension_numbers<[1], [1], [0], [0], [0, 0, 1, 0], [], []>} : vector<16x256xf32>, vector<256x256xf32>, vector<16x256xf32> -> vector<16x256xf32>
    %26 = vector.broadcast %0 : f32 to vector<16x256xf32>
    %27 = arith.mulf %26, %25 : vector<16x256xf32>
    %28 = arith.addf %27, %2 : vector<16x256xf32>
    %c0_18 = arith.constant 0 : index
    %c0_19 = arith.constant 0 : index
    %c0_20 = arith.constant 0 : index
    %29 = vector.load %arg7[%c0_18, %c0_19, %c0_20] : memref<1x16x256xf32, #tpu.memory_space<vmem>>, vector<1x16x256xf32>
    %30 = vector.shape_cast %29 : vector<1x16x256xf32> to vector<16x256xf32>
    %31 = vector.shape_cast %28 : vector<16x256xf32> to vector<1x16x256xf32>
    tpu.vector_store %arg7[%c0_18, %c0_19, %c0_20], %31 {strides = array<i32>} : memref<1x16x256xf32, #tpu.memory_space<vmem>>, vector<1x16x256xf32>,
    return
  }
  func.func @transform_0(%arg0: i32, %arg1: i32) -> i32 {
    %c0_i32 = arith.constant 0 : i32
    %c0_i32_0 = arith.constant 0 : i32
    return %c0_i32 : i32
  }
  func.func @transform_1(%arg0: i32, %arg1: i32) -> (i32, i32, i32) {
    %c0_i32 = arith.constant 0 : i32
    %c0_i32_0 = arith.constant 0 : i32
    return %arg0, %c0_i32, %arg1 : i32, i32, i32
  }
  func.func @transform_2(%arg0: i32, %arg1: i32) -> (i32, i32, i32) {
    %c0_i32 = arith.constant 0 : i32
    %c0_i32_0 = arith.constant 0 : i32
    %c0_i32_1 = arith.constant 0 : i32
    return %arg0, %c0_i32, %c0_i32_0 : i32, i32, i32
  }
  func.func @transform_3(%arg0: i32, %arg1: i32) -> (i32, i32, i32) {
    %c0_i32 = arith.constant 0 : i32
    %c0_i32_0 = arith.constant 0 : i32
    %c0_i32_1 = arith.constant 0 : i32
    return %arg0, %c0_i32, %c0_i32_0 : i32, i32, i32
  }
  func.func @transform_4(%arg0: i32, %arg1: i32) -> (i32, i32, i32) {
    %c0_i32 = arith.constant 0 : i32
    %c0_i32_0 = arith.constant 0 : i32
    %c0_i32_1 = arith.constant 0 : i32
    return %arg0, %c0_i32, %c0_i32_0 : i32, i32, i32
  }
  func.func @transform_5(%arg0: i32, %arg1: i32) -> (i32, i32, i32) {
    %c0_i32 = arith.constant 0 : i32
    %c0_i32_0 = arith.constant 0 : i32
    return %arg0, %c0_i32, %arg1 : i32, i32, i32
  }
  func.func @transform_6(%arg0: i32, %arg1: i32) -> (i32, i32, i32) {
    %c0_i32 = arith.constant 0 : i32
    %c0_i32_0 = arith.constant 0 : i32
    return %arg0, %arg1, %c0_i32 : i32, i32, i32
  }
}

</mosaic_0001>

<llo_original>
// kernel: tpu_custom_call.1
$region0: #{tpu_custom_call.1}
  #allocation0 [shape = 'u32[]', space=smem, size = 0x4, offset = 0x4, fixed_abs, tag = 'smem constant byte address 0x4 - core index']
  #allocation1 [shape = 'u32[144,128]{1,0:T(1,128)}', space=vmem, size = 0x12000, scoped, tag = 'internal scratch']
  #allocation2 [shape = 'f32[1]{0:T(128)S(6)}', space=smem, size = 0x200, scoped, tag = 'scoped memory for tpu_custom_call.1']
  %s0 = inlined_call_operand.<no memory space> [shape: f32[1], index: 0, kind: input, shape index: {}]
  %s1 = inlined_call_operand.hbm [shape: f32[2,16,256], index: 1, kind: input, shape index: {}]
  %s2 = inlined_call_operand.hbm [shape: f32[2,16,256], index: 2, kind: input, shape index: {}]
  %s3 = inlined_call_operand.hbm [shape: f32[2,16,256], index: 3, kind: input, shape index: {}]
  %s4 = inlined_call_operand.vmem [shape: f32[2,1,256], index: 4, kind: input, shape index: {}]
  %s5 = inlined_call_operand.hbm [shape: f32[2,16,256], index: 5, kind: output, shape index: {0}]
  %s6 = inlined_call_operand.hbm [shape: f32[2,256,256], index: 6, kind: output, shape index: {1}]
  %7 = xla_tuple %s5, %s6
  %s8 = sld [smem:[#allocation0]]
  $region73: #{tpu_custom_call.1} parent=0
    _
  %s10 = ssub.s32 1, %s8
  %s11 = scalar_select 0, %s10, %s8
  %12 = sst [smem:[#allocation2]] %s0
  $region1: #{tpu_custom_call.1} parent=0
    #allocation3 [shape = 'u8[32768]{0}', space=vmem, size = 0x8000, scoped, tag = 'input window, operand 1']
    #allocation4 [shape = 's32[2]{0}', space=sflag, size = 0x8, scoped, tag = 'scoped memory for tpu_custom_call.1']
    #allocation5 [shape = 's32[2]{0}', space=sflag, size = 0x8, scoped, tag = 'scoped memory for tpu_custom_call.1']
    #allocation6 [shape = 'u8[32768]{0}', space=vmem, size = 0x8000, scoped, tag = 'input window, operand 2']
    #allocation7 [shape = 's32[2]{0}', space=sflag, size = 0x8, scoped, tag = 'scoped memory for tpu_custom_call.1']
    #allocation8 [shape = 'u8[32768]{0}', space=vmem, size = 0x8000, scoped, tag = 'input window, operand 3']
    #allocation9 [shape = 'u8[32768]{0}', space=vmem, size = 0x8000, scoped, tag = 'output window, operand 0']
    #allocation10 [shape = 'u8[524288]{0}', space=vmem, size = 0x80000, scoped, tag = 'output window, operand 1']
    #allocation11 [shape = 's32[2]{0}', space=sflag, size = 0x8, scoped, tag = 'scoped memory for tpu_custom_call.1']
    %13 = vsyncpa [#allocation4], 0
    %s14 = scalar_lea.sflag [#allocation4], 1
    %15 = vsyncpa %s14, 0
    %16 = vsyncpa [#allocation7], 0
    %s17 = scalar_lea.sflag [#allocation7], 1
    %18 = vsyncpa %s17, 0
    %19 = vsyncpa [#allocation5], 0
    %s20 = scalar_lea.sflag [#allocation5], 1
    %21 = vsyncpa %s20, 0
    %22 = vsyncpa [#allocation11], 0
    %s23 = scalar_lea.sflag [#allocation11], 1
    %24 = vsyncpa %s23, 0
    loop: start=0, step=1, limit=4
    $region2: #{tpu_custom_call.1} parent=1 // loop_pre_header
      _
    $region3: #{tpu_custom_call.1} parent=1 // loop_header
      %s26 = sphi 0, %s30
      %p27 = scmp.ge.s32.totalorder %s26, 4
      %s33 = sphi 0, %s45
      %s34 = sphi 0, %s41
      %s35 = sphi 0, %s33
      %s36 = sphi 0, %s34
      %s37 = sphi 0, %s35
      %s38 = sphi 0, %s36
      %s46 = sphi 0, %s46
      %s48 = sphi 0, %s46
      %s49 = sphi 0, %s48
      %s63 = sphi 0, %s49
      %s71 = sphi 0, %s73
      %s74 = sphi 0, %s71
      %s75 = sphi 0, %s74
      %s91 = sphi 0, %s75
      %s97 = sphi 0, %s99
      %s100 = sphi 0, %s97
      %s101 = sphi 0, %s100
      %s117 = sphi 0, %s101
      %s123 = sphi 0, %s125
      %s126 = sphi 0, %s123
      %s127 = sphi 0, %s126
      %s143 = sphi 0, %s127
      %s149 = sphi 0, %s151
      %s152 = sphi 0, %s149
      %s153 = sphi 0, %s152
      %s169 = sphi 0, %s153
      %s177 = sphi 0, %s179
      %s180 = sphi 0, %s177
      %s181 = sphi 0, %s180
      %s197 = sphi 0, %s181
      %s205 = sphi 0, %s207
      %s208 = sphi 0, %s205
      %s209 = sphi 0, %s208
      %s225 = sphi 0, %s209
    $region4: #{tpu_custom_call.1} parent=1 // loop_header_branch
      %29 = sbr.rel (%p27) target = $region8
    $region5: #{tpu_custom_call.1} parent=1 // loop_body
      %s31 = ssub.s32 %s26, 1
      %s32 = ssub.s32 %s26, 2
      %s39 = sadd.s32 1, %s34
      %p40 = scmp.ge.s32.totalorder %s39, 1
      %s41 = scalar_select %p40, 0, %s39
      %s42 = sadd.s32 1, %s33
      %s43 = scalar_select %p40, %s42, %s33
      %p44 = scmp.ge.s32.totalorder %s43, 2
      %s45 = scalar_select %p44, 0, %s43
      %s47 = sadd.s32 %s46, 1
      %p50 = scmp.eq.s32.totalorder %s26, 1
      %p51 = scmp.ne.s32.totalorder %s46, %s48
      %p52 = scmp.eq.s32.totalorder %s26, 0
      %p53 = por %p51, %p52
      %p54 = scmp.ne.s32.totalorder %s46, %s48
      %p55 = scmp.eq.s32.totalorder %s31, 1
      %p56 = por %p54, %p55
      %p57 = scmp.ne.s32.totalorder %s48, %s49
      %p58 = scmp.eq.s32.totalorder %s31, 0
      %p59 = por %p57, %p58
      %p60 = scmp.ne.s32.totalorder %s48, %s49
      %p61 = scmp.eq.s32.totalorder %s32, 1
      %p62 = por %p60, %p61
      %p64 = scmp.ne.s32.totalorder %s49, %s63
      %p65 = scmp.eq.s32.totalorder %s32, 0
      %p66 = por %p64, %p65
      %s67 = ssub.s32 %s33, %s45
      %s68 = ssub.s32 %s34, %s41
      %s69 = sor.u32 %s67, %s68
      %p70 = scmp.eq.s32.totalorder %s69, 0
      %s72 = sadd.s32 %s71, 1
      %s73 = scalar_select %p70, %s71, %s72
      %p76 = pneg %p70
      %p77 = scmp.eq.s32.totalorder %s26, 1
      %p78 = por %p76, %p77
      %p79 = scmp.ne.s32.totalorder %s71, %s74
      %p80 = scmp.eq.s32.totalorder %s26, 0
      %p81 = por %p79, %p80
      %p82 = scmp.ne.s32.totalorder %s71, %s74
      %p83 = scmp.eq.s32.totalorder %s31, 1
      %p84 = por %p82, %p83
      %p85 = scmp.ne.s32.totalorder %s74, %s75
      %p86 = scmp.eq.s32.totalorder %s31, 0
      %p87 = por %p85, %p86
      %p88 = scmp.ne.s32.totalorder %s74, %s75
      %p89 = scmp.eq.s32.totalorder %s32, 1
      %p90 = por %p88, %p89
      %p92 = scmp.ne.s32.totalorder %s75, %s91
      %p93 = scmp.eq.s32.totalorder %s32, 0
      %p94 = por %p92, %p93
      %s95 = ssub.s32 %s33, %s45
      %p96 = scmp.eq.s32.totalorder %s95, 0
      %s98 = sadd.s32 %s97, 1
      %s99 = scalar_select %p96, %s97, %s98
      %p102 = pneg %p96
      %p103 = scmp.eq.s32.totalorder %s26, 1
      %p104 = por %p102, %p103
      %p105 = scmp.ne.s32.totalorder %s97, %s100
      %p106 = scmp.eq.s32.totalorder %s26, 0
      %p107 = por %p105, %p106
      %p108 = scmp.ne.s32.totalorder %s97, %s100
      %p109 = scmp.eq.s32.totalorder %s31, 1
      %p110 = por %p108, %p109
      %p111 = scmp.ne.s32.totalorder %s100, %s101
      %p112 = scmp.eq.s32.totalorder %s31, 0
      %p113 = por %p111, %p112
      %p114 = scmp.ne.s32.totalorder %s100, %s101
      %p115 = scmp.eq.s32.totalorder %s32, 1
      %p116 = por %p114, %p115
      %p118 = scmp.ne.s32.totalorder %s101, %s117
      %p119 = scmp.eq.s32.totalorder %s32, 0
      %p120 = por %p118, %p119
      %s121 = ssub.s32 %s33, %s45
      %p122 = scmp.eq.s32.totalorder %s121, 0
      %s124 = sadd.s32 %s123, 1
      %s125 = scalar_select %p122, %s123, %s124
      %p128 = pneg %p122
      %p129 = scmp.eq.s32.totalorder %s26, 1
      %p130 = por %p128, %p129
      %p131 = scmp.ne.s32.totalorder %s123, %s126
      %p132 = scmp.eq.s32.totalorder %s26, 0
      %p133 = por %p131, %p132
      %p134 = scmp.ne.s32.totalorder %s123, %s126
      %p135 = scmp.eq.s32.totalorder %s31, 1
      %p136 = por %p134, %p135
      %p137 = scmp.ne.s32.totalorder %s126, %s127
      %p138 = scmp.eq.s32.totalorder %s31, 0
      %p139 = por %p137, %p138
      %p140 = scmp.ne.s32.totalorder %s126, %s127
      %p141 = scmp.eq.s32.totalorder %s32, 1
      %p142 = por %p140, %p141
      %p144 = scmp.ne.s32.totalorder %s127, %s143
      %p145 = scmp.eq.s32.totalorder %s32, 0
      %p146 = por %p144, %p145
      %s147 = ssub.s32 %s33, %s45
      %p148 = scmp.eq.s32.totalorder %s147, 0
      %s150 = sadd.s32 %s149, 1
      %s151 = scalar_select %p148, %s149, %s150
      %p154 = pneg %p148
      %p155 = scmp.eq.s32.totalorder %s26, 1
      %p156 = por %p154, %p155
      %p157 = scmp.ne.s32.totalorder %s149, %s152
      %p158 = scmp.eq.s32.totalorder %s26, 0
      %p159 = por %p157, %p158
      %p160 = scmp.ne.s32.totalorder %s149, %s152
      %p161 = scmp.eq.s32.totalorder %s31, 1
      %p162 = por %p160, %p161
      %p163 = scmp.ne.s32.totalorder %s152, %s153
      %p164 = scmp.eq.s32.totalorder %s31, 0
      %p165 = por %p163, %p164
      %p166 = scmp.ne.s32.totalorder %s152, %s153
      %p167 = scmp.eq.s32.totalorder %s32, 1
      %p168 = por %p166, %p167
      %p170 = scmp.ne.s32.totalorder %s153, %s169
      %p171 = scmp.eq.s32.totalorder %s32, 0
      %p172 = por %p170, %p171
      %s173 = ssub.s32 %s33, %s45
      %s174 = ssub.s32 %s34, %s41
      %s175 = sor.u32 %s173, %s174
      %p176 = scmp.eq.s32.totalorder %s175, 0
      %s178 = sadd.s32 %s177, 1
      %s179 = scalar_select %p176, %s177, %s178
      %p182 = pneg %p176
      %p183 = scmp.eq.s32.totalorder %s26, 1
      %p184 = por %p182, %p183
      %p185 = scmp.ne.s32.totalorder %s177, %s180
      %p186 = scmp.eq.s32.totalorder %s26, 0
      %p187 = por %p185, %p186
      %p188 = scmp.ne.s32.totalorder %s177, %s180
      %p189 = scmp.eq.s32.totalorder %s31, 1
      %p190 = por %p188, %p189
      %p191 = scmp.ne.s32.totalorder %s180, %s181
      %p192 = scmp.eq.s32.totalorder %s31, 0
      %p193 = por %p191, %p192
      %p194 = scmp.ne.s32.totalorder %s180, %s181
      %p195 = scmp.eq.s32.totalorder %s32, 1
      %p196 = por %p194, %p195
      %p198 = scmp.ne.s32.totalorder %s181, %s197
      %p199 = scmp.eq.s32.totalorder %s32, 0
      %p200 = por %p198, %p199
      %s201 = ssub.s32 %s33, %s45
      %s202 = ssub.s32 %s34, %s41
      %s203 = sor.u32 %s201, %s202
      %p204 = scmp.eq.s32.totalorder %s203, 0
      %s206 = sadd.s32 %s205, 1
      %s207 = scalar_select %p204, %s205, %s206
      %p210 = pneg %p204
      %p211 = scmp.eq.s32.totalorder %s26, 1
      %p212 = por %p210, %p211
      %p213 = scmp.ne.s32.totalorder %s205, %s208
      %p214 = scmp.eq.s32.totalorder %s26, 0
      %p215 = por %p213, %p214
      %p216 = scmp.ne.s32.totalorder %s205, %s208
      %p217 = scmp.eq.s32.totalorder %s31, 1
      %p218 = por %p216, %p217
      %p219 = scmp.ne.s32.totalorder %s208, %s209
      %p220 = scmp.eq.s32.totalorder %s31, 0
      %p221 = por %p219, %p220
      %p222 = scmp.ne.s32.totalorder %s208, %s209
      %p223 = scmp.eq.s32.totalorder %s32, 1
      %p224 = por %p222, %p223
      %p226 = scmp.ne.s32.totalorder %s209, %s225
      %p227 = scmp.eq.s32.totalorder %s32, 0
      %p228 = por %p226, %p227
      %p229 = scmp.le.s32.totalorder 1, %s26
      %p230 = scmp.lt.s32.totalorder %s26, 3
      %p231 = pnand %p229, %p230
      %p232 = pneg %p231
      // Predicated region
      $region9: #{tpu_custom_call.1} parent=5 // pred_check
        _
      $region10: #{tpu_custom_call.1} parent=5 // pred_check_branch
        %234 = sbr.rel (%p231) target = $region12
      $region11: #{tpu_custom_call.1} parent=5 // pred_region
        %s235 = ssub.s32 %s26, 1
        // Predicated region
        $region13: #{tpu_custom_call.1} parent=11 // pred_check
          %p236 = pneg %p59
        $region14: #{tpu_custom_call.1} parent=11 // pred_check_branch
          %238 = sbr.rel (%p236) target = $region16
        $region15: #{tpu_custom_call.1} parent=11 // pred_region
          _
        $region16: #{tpu_custom_call.1} parent=11 // pred_fallthru
          _
      $region12: #{tpu_custom_call.1} parent=5 // pred_fallthru
        _
      %p239 = scmp.lt.s32.totalorder %s26, 2
      // Predicated region
      $region17: #{tpu_custom_call.1} parent=5 // pred_check
        %p240 = pneg %p239
      $region18: #{tpu_custom_call.1} parent=5 // pred_check_branch
        %242 = sbr.rel (%p240) target = $region20
      $region19: #{tpu_custom_call.1} parent=5 // pred_region
        // Predicated region
        $region21: #{tpu_custom_call.1} parent=19 // pred_check
          %p243 = pneg %p81
        $region22: #{tpu_custom_call.1} parent=19 // pred_check_branch
          %245 = sbr.rel (%p243) target = $region24
        $region23: #{tpu_custom_call.1} parent=19 // pred_region
          %s246 = sand.u32 %s71, 1
          %s247 = scalar_lea.sflag [#allocation4], %s246
          %s248 = sand.u32 %s71, 1
          %s249 = smul.addr %s248, 32
          %s250 = scalar_lea.vmem [#allocation3], %s249
          %s251 = smul.u32 2, %s34
          %s253 = ssub.s32 512, 512
          %254 = vsyncadd %s247, %s253
          %s255 = smul.addr %s33, 4
          %s256 = sadd.s32 %s251, %s255
          %s257 = smul.addr %s256, 128
          %s258 = scalar_lea.hbm %s1, %s257
          %s259 = sshll.u32 %s250, 4
          %s260 = int_to_ptr.vmem [resolvable:$true] %s259
          %265 = dma.hbm_to_vmem [thread:$0]  %s258, 512, %s260, %s247, 256, 256, 16
        $region24: #{tpu_custom_call.1} parent=19 // pred_fallthru
          _
        // Predicated region
        $region25: #{tpu_custom_call.1} parent=19 // pred_check
          %p266 = pneg %p107
        $region26: #{tpu_custom_call.1} parent=19 // pred_check_branch
          %268 = sbr.rel (%p266) target = $region28
        $region27: #{tpu_custom_call.1} parent=19 // pred_region
          %s269 = sand.u32 %s26, 1
          %s270 = scalar_lea.sflag [#allocation7], %s269
          %s271 = sand.u32 %s97, 1
          %s272 = smul.addr %s271, 32
          %s273 = scalar_lea.vmem [#allocation6], %s272
          %s275 = ssub.s32 512, 512
          %276 = vsyncadd %s270, %s275
          %s277 = smul.addr %s33, 4
          %s278 = smul.addr %s277, 128
          %s279 = scalar_lea.hbm %s2, %s278
          %s280 = sshll.u32 %s273, 4
          %s281 = int_to_ptr.vmem [resolvable:$true] %s280
          %286 = dma.hbm_to_vmem [thread:$0]  %s279, 512, %s281, %s270, 256, 256, 16
        $region28: #{tpu_custom_call.1} parent=19 // pred_fallthru
          _
        // Predicated region
        $region29: #{tpu_custom_call.1} parent=19 // pred_check
          %p287 = pneg %p133
        $region30: #{tpu_custom_call.1} parent=19 // pred_check_branch
          %289 = sbr.rel (%p287) target = $region32
        $region31: #{tpu_custom_call.1} parent=19 // pred_region
          %s290 = sand.u32 %s26, 1
          %s291 = scalar_lea.sflag [#allocation7], %s290
          %s292 = sand.u32 %s123, 1
          %s293 = smul.addr %s292, 32
          %s294 = scalar_lea.vmem [#allocation8], %s293
          %s296 = ssub.s32 512, 512
          %297 = vsyncadd %s291, %s296
          %s298 = smul.addr %s33, 4
          %s299 = smul.addr %s298, 128
          %s300 = scalar_lea.hbm %s3, %s299
          %s301 = sshll.u32 %s294, 4
          %s302 = int_to_ptr.vmem [resolvable:$true] %s301
          %307 = dma.hbm_to_vmem [thread:$0]  %s300, 512, %s302, %s291, 256, 256, 16
        $region32: #{tpu_custom_call.1} parent=19 // pred_fallthru
          _
        // Predicated region
        $region33: #{tpu_custom_call.1} parent=19 // pred_check
          %p308 = pneg %p159
        $region34: #{tpu_custom_call.1} parent=19 // pred_check_branch
          %310 = sbr.rel (%p308) target = $region36
        $region35: #{tpu_custom_call.1} parent=19 // pred_region
          %p311 = scmp.lt.s32.totalorder %s33, 1
          %s312 = scalar_select %p311, %s33, 1
          %s313 = smul.addr %s312, 2
          %s314 = scalar_lea.vmem %s4, %s313
        $region36: #{tpu_custom_call.1} parent=19 // pred_fallthru
          _
      $region20: #{tpu_custom_call.1} parent=5 // pred_fallthru
        _
      %p315 = scmp.le.s32.totalorder 1, %s26
      %p316 = scmp.lt.s32.totalorder %s26, 3
      %p317 = pnand %p315, %p316
      %p318 = pneg %p317
      // Predicated region
      $region37: #{tpu_custom_call.1} parent=5 // pred_check
        _
      $region38: #{tpu_custom_call.1} parent=5 // pred_check_branch
        %320 = sbr.rel (%p317) target = $region40
      $region39: #{tpu_custom_call.1} parent=5 // pred_region
        %s321 = ssub.s32 %s26, 1
        %s322 = sand.u32 %s74, 1
        %s323 = scalar_lea.sflag [#allocation4], %s322
        %s324 = sand.u32 %s74, 1
        %s325 = smul.addr %s324, 32
        %s326 = scalar_lea.vmem [#allocation3], %s325
        // Predicated region
        $region41: #{tpu_custom_call.1} parent=39 // pred_check
          %p327 = pneg %p87
        $region42: #{tpu_custom_call.1} parent=39 // pred_check_branch
          %329 = sbr.rel (%p327) target = $region44
        $region43: #{tpu_custom_call.1} parent=39 // pred_region
          %330 = dma.done %s323, 512
        $region44: #{tpu_custom_call.1} parent=39 // pred_fallthru
          _
        %s331 = sand.u32 %s31, 1
        %s332 = scalar_lea.sflag [#allocation7], %s331
        %s333 = sand.u32 %s100, 1
        %s334 = smul.addr %s333, 32
        %s335 = scalar_lea.vmem [#allocation6], %s334
        // Predicated region
        $region45: #{tpu_custom_call.1} parent=39 // pred_check
          %p336 = pneg %p113
        $region46: #{tpu_custom_call.1} parent=39 // pred_check_branch
          %338 = sbr.rel (%p336) target = $region48
        $region47: #{tpu_custom_call.1} parent=39 // pred_region
          %339 = dma.done %s332, 512
        $region48: #{tpu_custom_call.1} parent=39 // pred_fallthru
          _
        %s340 = sand.u32 %s31, 1
        %s341 = scalar_lea.sflag [#allocation7], %s340
        %s342 = sand.u32 %s126, 1
        %s343 = smul.addr %s342, 32
        %s344 = scalar_lea.vmem [#allocation8], %s343
        // Predicated region
        $region49: #{tpu_custom_call.1} parent=39 // pred_check
          %p345 = pneg %p139
        $region50: #{tpu_custom_call.1} parent=39 // pred_check_branch
          %347 = sbr.rel (%p345) target = $region52
        $region51: #{tpu_custom_call.1} parent=39 // pred_region
          %348 = dma.done %s341, 512
        $region52: #{tpu_custom_call.1} parent=39 // pred_fallthru
          _
        %p349 = pneg %p59
        %p350 = pneg %p56
        %s351 = sand.u32 %s74, 1
        %s352 = scalar_lea.sflag [#allocation4], %s351
        %s353 = sand.u32 %s74, 1
        %s354 = smul.addr %s353, 32
        %s355 = scalar_lea.vmem [#allocation3], %s354
        %p356 = pneg %p87
        %p357 = pneg %p84
        %s358 = sand.u32 %s31, 1
        %s359 = scalar_lea.sflag [#allocation7], %s358
        %s360 = sand.u32 %s100, 1
        %s361 = smul.addr %s360, 32
        %s362 = scalar_lea.vmem [#allocation6], %s361
        %p363 = pneg %p113
        %p364 = pneg %p110
        %s365 = sand.u32 %s31, 1
        %s366 = scalar_lea.sflag [#allocation7], %s365
        %s367 = sand.u32 %s126, 1
        %s368 = smul.addr %s367, 32
        %s369 = scalar_lea.vmem [#allocation8], %s368
        %p370 = pneg %p139
        %p371 = pneg %p136
        %p372 = scmp.lt.s32.totalorder %s35, 1
        %s373 = scalar_select %p372, %s35, 1
        %s374 = smul.addr %s373, 2
        %s375 = scalar_lea.vmem %s4, %s374
        %p376 = pneg %p165
        %p377 = pneg %p162
        %p378 = pneg %p193
        %p379 = pneg %p190
        %s380 = sand.u32 %s180, 1
        %s381 = scalar_lea.sflag [#allocation5], %s380
        %s382 = sand.u32 %s180, 1
        %s383 = smul.addr %s382, 32
        %s384 = scalar_lea.vmem [#allocation9], %s383
        %p385 = pneg %p221
        %p386 = pneg %p218
        %s387 = sand.u32 %s208, 1
        %s388 = scalar_lea.sflag [#allocation11], %s387
        %s389 = sand.u32 %s208, 1
        %s390 = smul.addr %s389, 512
        %s391 = scalar_lea.vmem [#allocation10], %s390
        %s392 = smul.u32 2, %s36
        %p393 = scmp.lt.s32.totalorder %s35, 1
        %s394 = scalar_select %p393, %s35, 1
        %s395 = smul.addr %s394, 2
        %s396 = scalar_lea.vmem %s4, %s395
        %s397 = smul.u32 2, %s36
        %s398 = smul.u32 32, %s36
        %s399 = sld [smem:[#allocation2]]
        %v400 = vld [vmem:[%s326] sm:$0xff]
        %v401 = vld [vmem:[%s326 + $0x8] sm:$0xff]
        %v402 = vld [vmem:[%s326 + $0x10] sm:$0xff]
        %v403 = vld [vmem:[%s326 + $0x18] sm:$0xff]
        %v404 = vld [vmem:[%s335] sm:$0xff]
        %v405 = vld [vmem:[%s335 + $0x8] sm:$0xff]
        %v406 = vld [vmem:[%s335 + $0x10] sm:$0xff]
        %v407 = vld [vmem:[%s335 + $0x18] sm:$0xff]
        %v408 = vld [vmem:[%s396] sm:$0x3]
        %v410 = vlaneseq
        %v411 = vshrl.u32 %v410, 7
        %v412 = vsub.s32 0, %v411
        %v413 = vrot.slane %v408, %v412
        %v414 = vlaneseq
        %v415 = vshrl.u32 %v414, 7
        %v416 = vsub.s32 1, %v415
        %v417 = vrot.slane %v408, %v416
        %420 = vxpose.xlu0.b32.start [1/16] %v400, 128
        %421 = vxpose.xlu0.b32.cont [2/16] %v402, 128
        %422 = vxpose.xlu0.b32.cont [3/16] 0.0, 128
        %423 = vxpose.xlu0.b32.cont [4/16] 0.0, 128
        %424 = vxpose.xlu0.b32.cont [5/16] 0.0, 128
        %425 = vxpose.xlu0.b32.cont [6/16] 0.0, 128
        %426 = vxpose.xlu0.b32.cont [7/16] 0.0, 128
        %427 = vxpose.xlu0.b32.cont [8/16] 0.0, 128
        %428 = vxpose.xlu0.b32.cont [9/16] 0.0, 128
        %429 = vxpose.xlu0.b32.cont [10/16] 0.0, 128
        %430 = vxpose.xlu0.b32.cont [11/16] 0.0, 128
        %431 = vxpose.xlu0.b32.cont [12/16] 0.0, 128
        %432 = vxpose.xlu0.b32.cont [13/16] 0.0, 128
        %433 = vxpose.xlu0.b32.cont [14/16] 0.0, 128
        %434 = vxpose.xlu0.b32.cont [15/16] 0.0, 128
        %435 = vxpose.xlu0.b32.end [16/16] 0.0, 128
        %v436 = vpop.trf.xlu0
        %v437 = vpop.trf.xlu0
        %v438 = vpop.trf.xlu0
        %v439 = vpop.trf.xlu0
        %v440 = vpop.trf.xlu0
        %v441 = vpop.trf.xlu0
        %v442 = vpop.trf.xlu0
        %v443 = vpop.trf.xlu0
        %v444 = vpop.trf.xlu0
        %v445 = vpop.trf.xlu0
        %v446 = vpop.trf.xlu0
        %v447 = vpop.trf.xlu0
        %v448 = vpop.trf.xlu0
        %v449 = vpop.trf.xlu0
        %v450 = vpop.trf.xlu0
        %v451 = vpop.trf.xlu0
        %452 = vxpose.xlu0.b32.start [1/16] %v401, 128
        %453 = vxpose.xlu0.b32.cont [2/16] %v403, 128
        %454 = vxpose.xlu0.b32.cont [3/16] 0.0, 128
        %455 = vxpose.xlu0.b32.cont [4/16] 0.0, 128
        %456 = vxpose.xlu0.b32.cont [5/16] 0.0, 128
        %457 = vxpose.xlu0.b32.cont [6/16] 0.0, 128
        %458 = vxpose.xlu0.b32.cont [7/16] 0.0, 128
        %459 = vxpose.xlu0.b32.cont [8/16] 0.0, 128
        %460 = vxpose.xlu0.b32.cont [9/16] 0.0, 128
        %461 = vxpose.xlu0.b32.cont [10/16] 0.0, 128
        %462 = vxpose.xlu0.b32.cont [11/16] 0.0, 128
        %463 = vxpose.xlu0.b32.cont [12/16] 0.0, 128
        %464 = vxpose.xlu0.b32.cont [13/16] 0.0, 128
        %465 = vxpose.xlu0.b32.cont [14/16] 0.0, 128
        %466 = vxpose.xlu0.b32.cont [15/16] 0.0, 128
        %467 = vxpose.xlu0.b32.end [16/16] 0.0, 128
        %v468 = vpop.trf.xlu0
        %v469 = vpop.trf.xlu0
        %v470 = vpop.trf.xlu0
        %v471 = vpop.trf.xlu0
        %v472 = vpop.trf.xlu0
        %v473 = vpop.trf.xlu0
        %v474 = vpop.trf.xlu0
        %v475 = vpop.trf.xlu0
        %v476 = vpop.trf.xlu0
        %v477 = vpop.trf.xlu0
        %v478 = vpop.trf.xlu0
        %v479 = vpop.trf.xlu0
        %v480 = vpop.trf.xlu0
        %v481 = vpop.trf.xlu0
        %v482 = vpop.trf.xlu0
        %v483 = vpop.trf.xlu0
        %vm484 = vcmask 130048
        %v486 = vsel %vm484, %v436, 0
        %v489 = vsel %vm484, %v437, 0
        %v492 = vsel %vm484, %v438, 0
        %v495 = vsel %vm484, %v439, 0
        %v498 = vsel %vm484, %v440, 0
        %v501 = vsel %vm484, %v441, 0
        %v504 = vsel %vm484, %v442, 0
        %v507 = vsel %vm484, %v443, 0
        %v510 = vsel %vm484, %v444, 0
        %v513 = vsel %vm484, %v445, 0
        %v516 = vsel %vm484, %v446, 0
        %v519 = vsel %vm484, %v447, 0
        %v522 = vsel %vm484, %v448, 0
        %v525 = vsel %vm484, %v449, 0
        %v528 = vsel %vm484, %v450, 0
        %v531 = vsel %vm484, %v451, 0
        %v534 = vsel %vm484, %v468, 0
        %v537 = vsel %vm484, %v469, 0
        %v540 = vsel %vm484, %v470, 0
        %v543 = vsel %vm484, %v471, 0
        %v546 = vsel %vm484, %v472, 0
        %v549 = vsel %vm484, %v473, 0
        %v552 = vsel %vm484, %v474, 0
        %v555 = vsel %vm484, %v475, 0
        %v558 = vsel %vm484, %v476, 0
        %v561 = vsel %vm484, %v477, 0
        %v564 = vsel %vm484, %v478, 0
        %v567 = vsel %vm484, %v479, 0
        %v570 = vsel %vm484, %v480, 0
        %v573 = vsel %vm484, %v481, 0
        %v576 = vsel %vm484, %v482, 0
        %v579 = vsel %vm484, %v483, 0
        %581 = vmatprep.subr.mxu0 %v405
        %582 = vmatpush1.msra.mxu0 %v404
        %583 = vmatprep.subr.mxu0 %v407
        %584 = vmatpush1.msra.mxu0 %v406
        %585 = vmatprep.subr.mxu0 0.0
        %586 = vmatpush1.msra.mxu0 0.0
        %587 = vmatprep.subr.mxu0 0.0
        %588 = vmatpush1.msra.mxu0 0.0
        %589 = vmatprep.subr.mxu0 0.0
        %590 = vmatpush1.msra.mxu0 0.0
        %591 = vmatprep.subr.mxu0 0.0
        %592 = vmatpush1.msra.mxu0 0.0
        %593 = vmatprep.subr.mxu0 0.0
        %594 = vmatpush1.msra.mxu0 0.0
        %595 = vmatprep.subr.mxu0 0.0
        %596 = vmatpush1.msra.mxu0 0.0
        %597 = vmatprep.subr.mxu0 0.0
        %598 = vmatpush1.msra.mxu0 0.0
        %599 = vmatprep.subr.mxu0 0.0
        %600 = vmatpush1.msra.mxu0 0.0
        %601 = vmatprep.subr.mxu0 0.0
        %602 = vmatpush1.msra.mxu0 0.0
        %603 = vmatprep.subr.mxu0 0.0
        %604 = vmatpush1.msra.mxu0 0.0
        %605 = vmatprep.subr.mxu0 0.0
        %606 = vmatpush1.msra.mxu0 0.0
        %607 = vmatprep.subr.mxu0 0.0
        %608 = vmatpush1.msra.mxu0 0.0
        %609 = vmatprep.subr.mxu0 0.0
        %610 = vmatpush1.msra.mxu0 0.0
        %611 = vmatprep.subr.mxu0 0.0
        %612 = vmatpush1.msra.mxu0 0.0
        %613 = vmatprep.subr.mxu0 0.0
        %614 = vmatpush1.msra.mxu0 0.0
        %615 = vmatprep.subr.mxu0 0.0
        %616 = vmatpush1.msra.mxu0 0.0
        %617 = vmatprep.subr.mxu0 0.0
        %618 = vmatpush1.msra.mxu0 0.0
        %619 = vmatprep.subr.mxu0 0.0
        %620 = vmatpush1.msra.mxu0 0.0
        %621 = vmatprep.subr.mxu0 0.0
        %622 = vmatpush1.msra.mxu0 0.0
        %623 = vmatprep.subr.mxu0 0.0
        %624 = vmatpush1.msra.mxu0 0.0
        %625 = vmatprep.subr.mxu0 0.0
        %626 = vmatpush1.msra.mxu0 0.0
        %627 = vmatprep.subr.mxu0 0.0
        %628 = vmatpush1.msra.mxu0 0.0
        %629 = vmatprep.subr.mxu0 0.0
        %630 = vmatpush1.msra.mxu0 0.0
        %631 = vmatprep.subr.mxu0 0.0
        %632 = vmatpush1.msra.mxu0 0.0
        %633 = vmatprep.subr.mxu0 0.0
        %634 = vmatpush1.msra.mxu0 0.0
        %635 = vmatprep.subr.mxu0 0.0
        %636 = vmatpush1.msra.mxu0 0.0
        %637 = vmatprep.subr.mxu0 0.0
        %638 = vmatpush1.msra.mxu0 0.0
        %639 = vmatprep.subr.mxu0 0.0
        %640 = vmatpush1.msra.mxu0 0.0
        %641 = vmatprep.subr.mxu0 0.0
        %642 = vmatpush1.msra.mxu0 0.0
        %643 = vmatprep.subr.mxu0 0.0
        %644 = vmatpush1.msra.mxu0 0.0
        %645 = vmatprep.mubr.f32.mxu0 0.0
        %646 = vmatmul.mubr.f32.gmra.mrb[0].mxu0 %v486
        %v647 = vpop.f32.mrb[0].mxu0
        %v648 = vadd.f32 %v413, %v647
        %v649 = vpop.f32.mrb[0].mxu0
        %v650 = vadd.f32 %v417, %v649
        %651 = vmatprep.mubr.f32.mxu0 0.0
        %652 = vmatmul.mubr.f32.gmra.mrb[0].mxu0 %v489
        %v653 = vpop.f32.mrb[0].mxu0
        %v654 = vadd.f32 %v413, %v653
        %v655 = vpop.f32.mrb[0].mxu0
        %v656 = vadd.f32 %v417, %v655
        %657 = vmatprep.mubr.f32.mxu0 0.0
        %658 = vmatmul.mubr.f32.gmra.mrb[0].mxu0 %v492
        %v659 = vpop.f32.mrb[0].mxu0
        %v660 = vadd.f32 %v413, %v659
        %v661 = vpop.f32.mrb[0].mxu0
        %v662 = vadd.f32 %v417, %v661
        %663 = vmatprep.mubr.f32.mxu0 0.0
        %664 = vmatmul.mubr.f32.gmra.mrb[0].mxu0 %v495
        %v665 = vpop.f32.mrb[0].mxu0
        %v666 = vadd.f32 %v413, %v665
        %v667 = vpop.f32.mrb[0].mxu0
        %v668 = vadd.f32 %v417, %v667
        %669 = vmatprep.mubr.f32.mxu0 0.0
        %670 = vmatmul.mubr.f32.gmra.mrb[0].mxu0 %v498
        %v671 = vpop.f32.mrb[0].mxu0
        %v672 = vadd.f32 %v413, %v671
        %v673 = vpop.f32.mrb[0].mxu0
        %v674 = vadd.f32 %v417, %v673
        %675 = vmatprep.mubr.f32.mxu0 0.0
        %676 = vmatmul.mubr.f32.gmra.mrb[0].mxu0 %v501
        %v677 = vpop.f32.mrb[0].mxu0
        %v678 = vadd.f32 %v413, %v677
        %v679 = vpop.f32.mrb[0].mxu0
        %v680 = vadd.f32 %v417, %v679
        %681 = vmatprep.mubr.f32.mxu0 0.0
        %682 = vmatmul.mubr.f32.gmra.mrb[0].mxu0 %v504
        %v683 = vpop.f32.mrb[0].mxu0
        %v684 = vadd.f32 %v413, %v683
        %v685 = vpop.f32.mrb[0].mxu0
        %v686 = vadd.f32 %v417, %v685
        %687 = vmatprep.mubr.f32.mxu0 0.0
        %688 = vmatmul.mubr.f32.gmra.mrb[0].mxu0 %v507
        %v689 = vpop.f32.mrb[0].mxu0
        %v690 = vadd.f32 %v413, %v689
        %v691 = vpop.f32.mrb[0].mxu0
        %v692 = vadd.f32 %v417, %v691
        %693 = vmatprep.mubr.f32.mxu0 0.0
        %694 = vmatmul.mubr.f32.gmra.mrb[0].mxu0 %v510
        %v695 = vpop.f32.mrb[0].mxu0
        %v696 = vadd.f32 %v413, %v695
        %v697 = vpop.f32.mrb[0].mxu0
        %v698 = vadd.f32 %v417, %v697
        %699 = vmatprep.mubr.f32.mxu0 0.0
        %700 = vmatmul.mubr.f32.gmra.mrb[0].mxu0 %v513
        %v701 = vpop.f32.mrb[0].mxu0
        %v702 = vadd.f32 %v413, %v701
        %v703 = vpop.f32.mrb[0].mxu0
        %v704 = vadd.f32 %v417, %v703
        %705 = vmatprep.mubr.f32.mxu0 0.0
        %706 = vmatmul.mubr.f32.gmra.mrb[0].mxu0 %v516
        %v707 = vpop.f32.mrb[0].mxu0
        %v708 = vadd.f32 %v413, %v707
        %v709 = vpop.f32.mrb[0].mxu0
        %v710 = vadd.f32 %v417, %v709
        %711 = vmatprep.mubr.f32.mxu0 0.0
        %712 = vmatmul.mubr.f32.gmra.mrb[0].mxu0 %v519
        %v713 = vpop.f32.mrb[0].mxu0
        %v714 = vadd.f32 %v413, %v713
        %v715 = vpop.f32.mrb[0].mxu0
        %v716 = vadd.f32 %v417, %v715
        %717 = vmatprep.mubr.f32.mxu0 0.0
        %718 = vmatmul.mubr.f32.gmra.mrb[0].mxu0 %v522
        %v719 = vpop.f32.mrb[0].mxu0
        %v720 = vadd.f32 %v413, %v719
        %v721 = vpop.f32.mrb[0].mxu0
        %v722 = vadd.f32 %v417, %v721
        %723 = vmatprep.mubr.f32.mxu0 0.0
        %724 = vmatmul.mubr.f32.gmra.mrb[0].mxu0 %v525
        %v725 = vpop.f32.mrb[0].mxu0
        %v726 = vadd.f32 %v413, %v725
        %v727 = vpop.f32.mrb[0].mxu0
        %v728 = vadd.f32 %v417, %v727
        %729 = vmatprep.mubr.f32.mxu0 0.0
        %730 = vmatmul.mubr.f32.gmra.mrb[0].mxu0 %v528
        %v731 = vpop.f32.mrb[0].mxu0
        %v732 = vadd.f32 %v413, %v731
        %v733 = vpop.f32.mrb[0].mxu0
        %v734 = vadd.f32 %v417, %v733
        %735 = vmatprep.mubr.f32.mxu0 0.0
        %736 = vmatmul.mubr.f32.gmra.mrb[0].mxu0 %v531
        %v737 = vpop.f32.mrb[0].mxu0
        %v738 = vadd.f32 %v413, %v737
        %v739 = vpop.f32.mrb[0].mxu0
        %v740 = vadd.f32 %v417, %v739
        %741 = vmatprep.mubr.f32.mxu0 0.0
        %742 = vmatmul.mubr.f32.gmra.mrb[0].mxu0 %v534
        %v743 = vpop.f32.mrb[0].mxu0
        %v744 = vadd.f32 %v413, %v743
        %v745 = vpop.f32.mrb[0].mxu0
        %v746 = vadd.f32 %v417, %v745
        %747 = vmatprep.mubr.f32.mxu0 0.0
        %748 = vmatmul.mubr.f32.gmra.mrb[0].mxu0 %v537
        %v749 = vpop.f32.mrb[0].mxu0
        %v750 = vadd.f32 %v413, %v749
        %v751 = vpop.f32.mrb[0].mxu0
        %v752 = vadd.f32 %v417, %v751
        %753 = vmatprep.mubr.f32.mxu0 0.0
        %754 = vmatmul.mubr.f32.gmra.mrb[0].mxu0 %v540
        %v755 = vpop.f32.mrb[0].mxu0
        %v756 = vadd.f32 %v413, %v755
        %v757 = vpop.f32.mrb[0].mxu0
        %v758 = vadd.f32 %v417, %v757
        %759 = vmatprep.mubr.f32.mxu0 0.0
        %760 = vmatmul.mubr.f32.gmra.mrb[0].mxu0 %v543
        %v761 = vpop.f32.mrb[0].mxu0
        %v762 = vadd.f32 %v413, %v761
        %v763 = vpop.f32.mrb[0].mxu0
        %v764 = vadd.f32 %v417, %v763
        %765 = vmatprep.mubr.f32.mxu0 0.0
        %766 = vmatmul.mubr.f32.gmra.mrb[0].mxu0 %v546
        %v767 = vpop.f32.mrb[0].mxu0
        %v768 = vadd.f32 %v413, %v767
        %v769 = vpop.f32.mrb[0].mxu0
        %v770 = vadd.f32 %v417, %v769
        %771 = vmatprep.mubr.f32.mxu0 0.0
        %772 = vmatmul.mubr.f32.gmra.mrb[0].mxu0 %v549
        %v773 = vpop.f32.mrb[0].mxu0
        %v774 = vadd.f32 %v413, %v773
        %v775 = vpop.f32.mrb[0].mxu0
        %v776 = vadd.f32 %v417, %v775
        %777 = vmatprep.mubr.f32.mxu0 0.0
        %778 = vmatmul.mubr.f32.gmra.mrb[0].mxu0 %v552
        %v779 = vpop.f32.mrb[0].mxu0
        %v780 = vadd.f32 %v413, %v779
        %v781 = vpop.f32.mrb[0].mxu0
        %v782 = vadd.f32 %v417, %v781
        %783 = vmatprep.mubr.f32.mxu0 0.0
        %784 = vmatmul.mubr.f32.gmra.mrb[0].mxu0 %v555
        %v785 = vpop.f32.mrb[0].mxu0
        %v786 = vadd.f32 %v413, %v785
        %v787 = vpop.f32.mrb[0].mxu0
        %v788 = vadd.f32 %v417, %v787
        %789 = vmatprep.mubr.f32.mxu0 0.0
        %790 = vmatmul.mubr.f32.gmra.mrb[0].mxu0 %v558
        %v791 = vpop.f32.mrb[0].mxu0
        %v792 = vadd.f32 %v413, %v791
        %v793 = vpop.f32.mrb[0].mxu0
        %v794 = vadd.f32 %v417, %v793
        %795 = vmatprep.mubr.f32.mxu0 0.0
        %796 = vmatmul.mubr.f32.gmra.mrb[0].mxu0 %v561
        %v797 = vpop.f32.mrb[0].mxu0
        %v798 = vadd.f32 %v413, %v797
        %v799 = vpop.f32.mrb[0].mxu0
        %v800 = vadd.f32 %v417, %v799
        %801 = vmatprep.mubr.f32.mxu0 0.0
        %802 = vmatmul.mubr.f32.gmra.mrb[0].mxu0 %v564
        %v803 = vpop.f32.mrb[0].mxu0
        %v804 = vadd.f32 %v413, %v803
        %v805 = vpop.f32.mrb[0].mxu0
        %v806 = vadd.f32 %v417, %v805
        %807 = vmatprep.mubr.f32.mxu0 0.0
        %808 = vmatmul.mubr.f32.gmra.mrb[0].mxu0 %v567
        %v809 = vpop.f32.mrb[0].mxu0
        %v810 = vadd.f32 %v413, %v809
        %v811 = vpop.f32.mrb[0].mxu0
        %v812 = vadd.f32 %v417, %v811
        %813 = vmatprep.mubr.f32.mxu0 0.0
        %814 = vmatmul.mubr.f32.gmra.mrb[0].mxu0 %v570
        %v815 = vpop.f32.mrb[0].mxu0
        %v816 = vadd.f32 %v413, %v815
        %v817 = vpop.f32.mrb[0].mxu0
        %v818 = vadd.f32 %v417, %v817
        %819 = vmatprep.mubr.f32.mxu0 0.0
        %820 = vmatmul.mubr.f32.gmra.mrb[0].mxu0 %v573
        %v821 = vpop.f32.mrb[0].mxu0
        %v822 = vadd.f32 %v413, %v821
        %v823 = vpop.f32.mrb[0].mxu0
        %v824 = vadd.f32 %v417, %v823
        %825 = vmatprep.mubr.f32.mxu0 0.0
        %826 = vmatmul.mubr.f32.gmra.mrb[0].mxu0 %v576
        %v827 = vpop.f32.mrb[0].mxu0
        %v828 = vadd.f32 %v413, %v827
        %v829 = vpop.f32.mrb[0].mxu0
        %v830 = vadd.f32 %v417, %v829
        %831 = vmatprep.mubr.f32.mxu0 0.0
        %832 = vmatmul.mubr.f32.gmra.mrb[0].mxu0 %v579
        %v833 = vpop.f32.mrb[0].mxu0
        %v834 = vadd.f32 %v413, %v833
        %v835 = vpop.f32.mrb[0].mxu0
        %v836 = vadd.f32 %v417, %v835
        %837 = vdwg.mxu0
        %v838 = vmax.f32 %v648, %v650
        %839 = vmax.xlane.f32.xlu0 %v838
        %v840 = vpop.xlane.xlu0 %839
        %v841 = vmax.f32 %v654, %v656
        %842 = vmax.xlane.f32.xlu0 %v841
        %v843 = vpop.xlane.xlu0 %842
        %v844 = vmax.f32 %v660, %v662
        %845 = vmax.xlane.f32.xlu0 %v844
        %v846 = vpop.xlane.xlu0 %845
        %v847 = vmax.f32 %v666, %v668
        %848 = vmax.xlane.f32.xlu0 %v847
        %v849 = vpop.xlane.xlu0 %848
        %v850 = vmax.f32 %v672, %v674
        %851 = vmax.xlane.f32.xlu0 %v850
        %v852 = vpop.xlane.xlu0 %851
        %v853 = vmax.f32 %v678, %v680
        %854 = vmax.xlane.f32.xlu0 %v853
        %v855 = vpop.xlane.xlu0 %854
        %v856 = vmax.f32 %v684, %v686
        %857 = vmax.xlane.f32.xlu0 %v856
        %v858 = vpop.xlane.xlu0 %857
        %v859 = vmax.f32 %v690, %v692
        %860 = vmax.xlane.f32.xlu0 %v859
        %v861 = vpop.xlane.xlu0 %860
        %v862 = vmax.f32 %v696, %v698
        %863 = vmax.xlane.f32.xlu0 %v862
        %v864 = vpop.xlane.xlu0 %863
        %v865 = vmax.f32 %v702, %v704
        %866 = vmax.xlane.f32.xlu0 %v865
        %v867 = vpop.xlane.xlu0 %866
        %v868 = vmax.f32 %v708, %v710
        %869 = vmax.xlane.f32.xlu0 %v868
        %v870 = vpop.xlane.xlu0 %869
        %v871 = vmax.f32 %v714, %v716
        %872 = vmax.xlane.f32.xlu0 %v871
        %v873 = vpop.xlane.xlu0 %872
        %v874 = vmax.f32 %v720, %v722
        %875 = vmax.xlane.f32.xlu0 %v874
        %v876 = vpop.xlane.xlu0 %875
        %v877 = vmax.f32 %v726, %v728
        %878 = vmax.xlane.f32.xlu0 %v877
        %v879 = vpop.xlane.xlu0 %878
        %v880 = vmax.f32 %v732, %v734
        %881 = vmax.xlane.f32.xlu0 %v880
        %v882 = vpop.xlane.xlu0 %881
        %v883 = vmax.f32 %v738, %v740
        %884 = vmax.xlane.f32.xlu0 %v883
        %v885 = vpop.xlane.xlu0 %884
        %v886 = vmax.f32 %v744, %v746
        %887 = vmax.xlane.f32.xlu0 %v886
        %v888 = vpop.xlane.xlu0 %887
        %v889 = vmax.f32 %v750, %v752
        %890 = vmax.xlane.f32.xlu0 %v889
        %v891 = vpop.xlane.xlu0 %890
        %v892 = vmax.f32 %v756, %v758
        %893 = vmax.xlane.f32.xlu0 %v892
        %v894 = vpop.xlane.xlu0 %893
        %v895 = vmax.f32 %v762, %v764
        %896 = vmax.xlane.f32.xlu0 %v895
        %v897 = vpop.xlane.xlu0 %896
        %v898 = vmax.f32 %v768, %v770
        %899 = vmax.xlane.f32.xlu0 %v898
        %v900 = vpop.xlane.xlu0 %899
        %v901 = vmax.f32 %v774, %v776
        %902 = vmax.xlane.f32.xlu0 %v901
        %v903 = vpop.xlane.xlu0 %902
        %v904 = vmax.f32 %v780, %v782
        %905 = vmax.xlane.f32.xlu0 %v904
        %v906 = vpop.xlane.xlu0 %905
        %v907 = vmax.f32 %v786, %v788
        %908 = vmax.xlane.f32.xlu0 %v907
        %v909 = vpop.xlane.xlu0 %908
        %v910 = vmax.f32 %v792, %v794
        %911 = vmax.xlane.f32.xlu0 %v910
        %v912 = vpop.xlane.xlu0 %911
        %v913 = vmax.f32 %v798, %v800
        %914 = vmax.xlane.f32.xlu0 %v913
        %v915 = vpop.xlane.xlu0 %914
        %v916 = vmax.f32 %v804, %v806
        %917 = vmax.xlane.f32.xlu0 %v916
        %v918 = vpop.xlane.xlu0 %917
        %v919 = vmax.f32 %v810, %v812
        %920 = vmax.xlane.f32.xlu0 %v919
        %v921 = vpop.xlane.xlu0 %920
        %v922 = vmax.f32 %v816, %v818
        %923 = vmax.xlane.f32.xlu0 %v922
        %v924 = vpop.xlane.xlu0 %923
        %v925 = vmax.f32 %v822, %v824
        %926 = vmax.xlane.f32.xlu0 %v925
        %v927 = vpop.xlane.xlu0 %926
        %v928 = vmax.f32 %v828, %v830
        %929 = vmax.xlane.f32.xlu0 %v928
        %v930 = vpop.xlane.xlu0 %929
        %v931 = vmax.f32 %v834, %v836
        %932 = vmax.xlane.f32.xlu0 %v931
        %v933 = vpop.xlane.xlu0 %932
        %v934 = vsub.f32 %v648, %v840
        %v935 = vsub.f32 %v650, %v840
        %v936 = vsub.f32 %v654, %v843
        %v937 = vsub.f32 %v656, %v843
        %v938 = vsub.f32 %v660, %v846
        %v939 = vsub.f32 %v662, %v846
        %v940 = vsub.f32 %v666, %v849
        %v941 = vsub.f32 %v668, %v849
        %v942 = vsub.f32 %v672, %v852
        %v943 = vsub.f32 %v674, %v852
        %v944 = vsub.f32 %v678, %v855
        %v945 = vsub.f32 %v680, %v855
        %v946 = vsub.f32 %v684, %v858
        %v947 = vsub.f32 %v686, %v858
        %v948 = vsub.f32 %v690, %v861
        %v949 = vsub.f32 %v692, %v861
        %v950 = vsub.f32 %v696, %v864
        %v951 = vsub.f32 %v698, %v864
        %v952 = vsub.f32 %v702, %v867
        %v953 = vsub.f32 %v704, %v867
        %v954 = vsub.f32 %v708, %v870
        %v955 = vsub.f32 %v710, %v870
        %v956 = vsub.f32 %v714, %v873
        %v957 = vsub.f32 %v716, %v873
        %v958 = vsub.f32 %v720, %v876
        %v959 = vsub.f32 %v722, %v876
        %v960 = vsub.f32 %v726, %v879
        %v961 = vsub.f32 %v728, %v879
        %v962 = vsub.f32 %v732, %v882
        %v963 = vsub.f32 %v734, %v882
        %v964 = vsub.f32 %v738, %v885
        %v965 = vsub.f32 %v740, %v885
        %v966 = vsub.f32 %v744, %v888
        %v967 = vsub.f32 %v746, %v888
        %v968 = vsub.f32 %v750, %v891
        %v969 = vsub.f32 %v752, %v891
        %v970 = vsub.f32 %v756, %v894
        %v971 = vsub.f32 %v758, %v894
        %v972 = vsub.f32 %v762, %v897
        %v973 = vsub.f32 %v764, %v897
        %v974 = vsub.f32 %v768, %v900
        %v975 = vsub.f32 %v770, %v900
        %v976 = vsub.f32 %v774, %v903
        %v977 = vsub.f32 %v776, %v903
        %v978 = vsub.f32 %v780, %v906
        %v979 = vsub.f32 %v782, %v906
        %v980 = vsub.f32 %v786, %v909
        %v981 = vsub.f32 %v788, %v909
        %v982 = vsub.f32 %v792, %v912
        %v983 = vsub.f32 %v794, %v912
        %v984 = vsub.f32 %v798, %v915
        %v985 = vsub.f32 %v800, %v915
        %v986 = vsub.f32 %v804, %v918
        %v987 = vsub.f32 %v806, %v918
        %v988 = vsub.f32 %v810, %v921
        %v989 = vsub.f32 %v812, %v921
        %v990 = vsub.f32 %v816, %v924
        %v991 = vsub.f32 %v818, %v924
        %v992 = vsub.f32 %v822, %v927
        %v993 = vsub.f32 %v824, %v927
        %v994 = vsub.f32 %v828, %v930
        %v995 = vsub.f32 %v830, %v930
        %v996 = vsub.f32 %v834, %v933
        %v997 = vsub.f32 %v836, %v933
        %v998 = vmul.f32 %v934, 1.442695
        %v999 = vpow.pop %v998
        %v1000 = vmul.f32 %v935, 1.442695
        %v1001 = vpow.pop %v1000
        %v1002 = vmul.f32 %v936, 1.442695
        %v1003 = vpow.pop %v1002
        %v1004 = vmul.f32 %v937, 1.442695
        %v1005 = vpow.pop %v1004
        %v1006 = vmul.f32 %v938, 1.442695
        %v1007 = vpow.pop %v1006
        %v1008 = vmul.f32 %v939, 1.442695
        %v1009 = vpow.pop %v1008
        %v1010 = vmul.f32 %v940, 1.442695
        %v1011 = vpow.pop %v1010
        %v1012 = vmul.f32 %v941, 1.442695
        %v1013 = vpow.pop %v1012
        %v1014 = vmul.f32 %v942, 1.442695
        %v1015 = vpow.pop %v1014
        %v1016 = vmul.f32 %v943, 1.442695
        %v1017 = vpow.pop %v1016
        %v1018 = vmul.f32 %v944, 1.442695
        %v1019 = vpow.pop %v1018
        %v1020 = vmul.f32 %v945, 1.442695
        %v1021 = vpow.pop %v1020
        %v1022 = vmul.f32 %v946, 1.442695
        %v1023 = vpow.pop %v1022
        %v1024 = vmul.f32 %v947, 1.442695
        %v1025 = vpow.pop %v1024
        %v1026 = vmul.f32 %v948, 1.442695
        %v1027 = vpow.pop %v1026
        %v1028 = vmul.f32 %v949, 1.442695
        %v1029 = vpow.pop %v1028
        %v1030 = vmul.f32 %v950, 1.442695
        %v1031 = vpow.pop %v1030
        %v1032 = vmul.f32 %v951, 1.442695
        %v1033 = vpow.pop %v1032
        %v1034 = vmul.f32 %v952, 1.442695
        %v1035 = vpow.pop %v1034
        %v1036 = vmul.f32 %v953, 1.442695
        %v1037 = vpow.pop %v1036
        %v1038 = vmul.f32 %v954, 1.442695
        %v1039 = vpow.pop %v1038
        %v1040 = vmul.f32 %v955, 1.442695
        %v1041 = vpow.pop %v1040
        %v1042 = vmul.f32 %v956, 1.442695
        %v1043 = vpow.pop %v1042
        %v1044 = vmul.f32 %v957, 1.442695
        %v1045 = vpow.pop %v1044
        %v1046 = vmul.f32 %v958, 1.442695
        %v1047 = vpow.pop %v1046
        %v1048 = vmul.f32 %v959, 1.442695
        %v1049 = vpow.pop %v1048
        %v1050 = vmul.f32 %v960, 1.442695
        %v1051 = vpow.pop %v1050
        %v1052 = vmul.f32 %v961, 1.442695
        %v1053 = vpow.pop %v1052
        %v1054 = vmul.f32 %v962, 1.442695
        %v1055 = vpow.pop %v1054
        %v1056 = vmul.f32 %v963, 1.442695
        %v1057 = vpow.pop %v1056
        %v1058 = vmul.f32 %v964, 1.442695
        %v1059 = vpow.pop %v1058
        %v1060 = vmul.f32 %v965, 1.442695
        %v1061 = vpow.pop %v1060
        %v1062 = vmul.f32 %v966, 1.442695
        %v1063 = vpow.pop %v1062
        %v1064 = vmul.f32 %v967, 1.442695
        %v1065 = vpow.pop %v1064
        %v1066 = vmul.f32 %v968, 1.442695
        %v1067 = vpow.pop %v1066
        %v1068 = vmul.f32 %v969, 1.442695
        %v1069 = vpow.pop %v1068
        %v1070 = vmul.f32 %v970, 1.442695
        %v1071 = vpow.pop %v1070
        %v1072 = vmul.f32 %v971, 1.442695
        %v1073 = vpow.pop %v1072
        %v1074 = vmul.f32 %v972, 1.442695
        %v1075 = vpow.pop %v1074
        %v1076 = vmul.f32 %v973, 1.442695
        %v1077 = vpow.pop %v1076
        %v1078 = vmul.f32 %v974, 1.442695
        %v1079 = vpow.pop %v1078
        %v1080 = vmul.f32 %v975, 1.442695
        %v1081 = vpow.pop %v1080
        %v1082 = vmul.f32 %v976, 1.442695
        %v1083 = vpow.pop %v1082
        %v1084 = vmul.f32 %v977, 1.442695
        %v1085 = vpow.pop %v1084
        %v1086 = vmul.f32 %v978, 1.442695
        %v1087 = vpow.pop %v1086
        %v1088 = vmul.f32 %v979, 1.442695
        %v1089 = vpow.pop %v1088
        %v1090 = vmul.f32 %v980, 1.442695
        %v1091 = vpow.pop %v1090
        %v1092 = vmul.f32 %v981, 1.442695
        %v1093 = vpow.pop %v1092
        %v1094 = vmul.f32 %v982, 1.442695
        %v1095 = vpow.pop %v1094
        %v1096 = vmul.f32 %v983, 1.442695
        %v1097 = vpow.pop %v1096
        %v1098 = vmul.f32 %v984, 1.442695
        %v1099 = vpow.pop %v1098
        %v1100 = vmul.f32 %v985, 1.442695
        %v1101 = vpow.pop %v1100
        %v1102 = vmul.f32 %v986, 1.442695
        %v1103 = vpow.pop %v1102
        %v1104 = vmul.f32 %v987, 1.442695
        %v1105 = vpow.pop %v1104
        %v1106 = vmul.f32 %v988, 1.442695
        %v1107 = vpow.pop %v1106
        %v1108 = vmul.f32 %v989, 1.442695
        %v1109 = vpow.pop %v1108
        %v1110 = vmul.f32 %v990, 1.442695
        %v1111 = vpow.pop %v1110
        %v1112 = vmul.f32 %v991, 1.442695
        %v1113 = vpow.pop %v1112
        %v1114 = vmul.f32 %v992, 1.442695
        %v1115 = vpow.pop %v1114
        %v1116 = vmul.f32 %v993, 1.442695
        %v1117 = vpow.pop %v1116
        %v1118 = vmul.f32 %v994, 1.442695
        %v1119 = vpow.pop %v1118
        %v1120 = vmul.f32 %v995, 1.442695
        %v1121 = vpow.pop %v1120
        %v1122 = vmul.f32 %v996, 1.442695
        %v1123 = vpow.pop %v1122
        %v1124 = vmul.f32 %v997, 1.442695
        %v1125 = vpow.pop %v1124
        %v1126 = vadd.f32 %v999, %v1001
        %1127 = vadd.xlane.f32.xlu0 %v1126
        %v1128 = vpop.xlane.xlu0 %1127
        %v1129 = vadd.f32 %v1003, %v1005
        %1130 = vadd.xlane.f32.xlu0 %v1129
        %v1131 = vpop.xlane.xlu0 %1130
        %v1132 = vadd.f32 %v1007, %v1009
        %1133 = vadd.xlane.f32.xlu0 %v1132
        %v1134 = vpop.xlane.xlu0 %1133
        %v1135 = vadd.f32 %v1011, %v1013
        %1136 = vadd.xlane.f32.xlu0 %v1135
        %v1137 = vpop.xlane.xlu0 %1136
        %v1138 = vadd.f32 %v1015, %v1017
        %1139 = vadd.xlane.f32.xlu0 %v1138
        %v1140 = vpop.xlane.xlu0 %1139
        %v1141 = vadd.f32 %v1019, %v1021
        %1142 = vadd.xlane.f32.xlu0 %v1141
        %v1143 = vpop.xlane.xlu0 %1142
        %v1144 = vadd.f32 %v1023, %v1025
        %1145 = vadd.xlane.f32.xlu0 %v1144
        %v1146 = vpop.xlane.xlu0 %1145
        %v1147 = vadd.f32 %v1027, %v1029
        %1148 = vadd.xlane.f32.xlu0 %v1147
        %v1149 = vpop.xlane.xlu0 %1148
        %v1150 = vadd.f32 %v1031, %v1033
        %1151 = vadd.xlane.f32.xlu0 %v1150
        %v1152 = vpop.xlane.xlu0 %1151
        %v1153 = vadd.f32 %v1035, %v1037
        %1154 = vadd.xlane.f32.xlu0 %v1153
        %v1155 = vpop.xlane.xlu0 %1154
        %v1156 = vadd.f32 %v1039, %v1041
        %1157 = vadd.xlane.f32.xlu0 %v1156
        %v1158 = vpop.xlane.xlu0 %1157
        %v1159 = vadd.f32 %v1043, %v1045
        %1160 = vadd.xlane.f32.xlu0 %v1159
        %v1161 = vpop.xlane.xlu0 %1160
        %v1162 = vadd.f32 %v1047, %v1049
        %1163 = vadd.xlane.f32.xlu0 %v1162
        %v1164 = vpop.xlane.xlu0 %1163
        %v1165 = vadd.f32 %v1051, %v1053
        %1166 = vadd.xlane.f32.xlu0 %v1165
        %v1167 = vpop.xlane.xlu0 %1166
        %v1168 = vadd.f32 %v1055, %v1057
        %1169 = vadd.xlane.f32.xlu0 %v1168
        %v1170 = vpop.xlane.xlu0 %1169
        %v1171 = vadd.f32 %v1059, %v1061
        %1172 = vadd.xlane.f32.xlu0 %v1171
        %v1173 = vpop.xlane.xlu0 %1172
        %v1174 = vadd.f32 %v1063, %v1065
        %1175 = vadd.xlane.f32.xlu0 %v1174
        %v1176 = vpop.xlane.xlu0 %1175
        %v1177 = vadd.f32 %v1067, %v1069
        %1178 = vadd.xlane.f32.xlu0 %v1177
        %v1179 = vpop.xlane.xlu0 %1178
        %v1180 = vadd.f32 %v1071, %v1073
        %1181 = vadd.xlane.f32.xlu0 %v1180
        %v1182 = vpop.xlane.xlu0 %1181
        %v1183 = vadd.f32 %v1075, %v1077
        %1184 = vadd.xlane.f32.xlu0 %v1183
        %v1185 = vpop.xlane.xlu0 %1184
        %v1186 = vadd.f32 %v1079, %v1081
        %1187 = vadd.xlane.f32.xlu0 %v1186
        %v1188 = vpop.xlane.xlu0 %1187
        %v1189 = vadd.f32 %v1083, %v1085
        %1190 = vadd.xlane.f32.xlu0 %v1189
        %v1191 = vpop.xlane.xlu0 %1190
        %v1192 = vadd.f32 %v1087, %v1089
        %1193 = vadd.xlane.f32.xlu0 %v1192
        %v1194 = vpop.xlane.xlu0 %1193
        %v1195 = vadd.f32 %v1091, %v1093
        %1196 = vadd.xlane.f32.xlu0 %v1195
        %v1197 = vpop.xlane.xlu0 %1196
        %v1198 = vadd.f32 %v1095, %v1097
        %1199 = vadd.xlane.f32.xlu0 %v1198
        %v1200 = vpop.xlane.xlu0 %1199
        %v1201 = vadd.f32 %v1099, %v1101
        %1202 = vadd.xlane.f32.xlu0 %v1201
        %v1203 = vpop.xlane.xlu0 %1202
        %v1204 = vadd.f32 %v1103, %v1105
        %1205 = vadd.xlane.f32.xlu0 %v1204
        %v1206 = vpop.xlane.xlu0 %1205
        %v1207 = vadd.f32 %v1107, %v1109
        %1208 = vadd.xlane.f32.xlu0 %v1207
        %v1209 = vpop.xlane.xlu0 %1208
        %v1210 = vadd.f32 %v1111, %v1113
        %1211 = vadd.xlane.f32.xlu0 %v1210
        %v1212 = vpop.xlane.xlu0 %1211
        %v1213 = vadd.f32 %v1115, %v1117
        %1214 = vadd.xlane.f32.xlu0 %v1213
        %v1215 = vpop.xlane.xlu0 %1214
        %v1216 = vadd.f32 %v1119, %v1121
        %1217 = vadd.xlane.f32.xlu0 %v1216
        %v1218 = vpop.xlane.xlu0 %1217
        %v1219 = vadd.f32 %v1123, %v1125
        %1220 = vadd.xlane.f32.xlu0 %v1219
        %v1221 = vpop.xlane.xlu0 %1220
        %v1222 = vrcp.pop %v1128
        %v1223 = vrcp.pop %v1131
        %v1224 = vrcp.pop %v1134
        %v1225 = vrcp.pop %v1137
        %v1226 = vrcp.pop %v1140
        %v1227 = vrcp.pop %v1143
        %v1228 = vrcp.pop %v1146
        %v1229 = vrcp.pop %v1149
        %v1230 = vrcp.pop %v1152
        %v1231 = vrcp.pop %v1155
        %v1232 = vrcp.pop %v1158
        %v1233 = vrcp.pop %v1161
        %v1234 = vrcp.pop %v1164
        %v1235 = vrcp.pop %v1167
        %v1236 = vrcp.pop %v1170
        %v1237 = vrcp.pop %v1173
        %v1238 = vrcp.pop %v1176
        %v1239 = vrcp.pop %v1179
        %v1240 = vrcp.pop %v1182
        %v1241 = vrcp.pop %v1185
        %v1242 = vrcp.pop %v1188
        %v1243 = vrcp.pop %v1191
        %v1244 = vrcp.pop %v1194
        %v1245 = vrcp.pop %v1197
        %v1246 = vrcp.pop %v1200
        %v1247 = vrcp.pop %v1203
        %v1248 = vrcp.pop %v1206
        %v1249 = vrcp.pop %v1209
        %v1250 = vrcp.pop %v1212
        %v1251 = vrcp.pop %v1215
        %v1252 = vrcp.pop %v1218
        %v1253 = vrcp.pop %v1221
        %v1254 = vmul.f32 %v999, %v1222
        %v1255 = vmul.f32 %v1001, %v1222
        %v1256 = vmul.f32 %v1003, %v1223
        %v1257 = vmul.f32 %v1005, %v1223
        %v1258 = vmul.f32 %v1007, %v1224
        %v1259 = vmul.f32 %v1009, %v1224
        %v1260 = vmul.f32 %v1011, %v1225
        %v1261 = vmul.f32 %v1013, %v1225
        %v1262 = vmul.f32 %v1015, %v1226
        %v1263 = vmul.f32 %v1017, %v1226
        %v1264 = vmul.f32 %v1019, %v1227
        %v1265 = vmul.f32 %v1021, %v1227
        %v1266 = vmul.f32 %v1023, %v1228
        %v1267 = vmul.f32 %v1025, %v1228
        %v1268 = vmul.f32 %v1027, %v1229
        %v1269 = vmul.f32 %v1029, %v1229
        %v1270 = vmul.f32 %v1031, %v1230
        %v1271 = vmul.f32 %v1033, %v1230
        %v1272 = vmul.f32 %v1035, %v1231
        %v1273 = vmul.f32 %v1037, %v1231
        %v1274 = vmul.f32 %v1039, %v1232
        %v1275 = vmul.f32 %v1041, %v1232
        %v1276 = vmul.f32 %v1043, %v1233
        %v1277 = vmul.f32 %v1045, %v1233
        %v1278 = vmul.f32 %v1047, %v1234
        %v1279 = vmul.f32 %v1049, %v1234
        %v1280 = vmul.f32 %v1051, %v1235
        %v1281 = vmul.f32 %v1053, %v1235
        %v1282 = vmul.f32 %v1055, %v1236
        %v1283 = vmul.f32 %v1057, %v1236
        %v1284 = vmul.f32 %v1059, %v1237
        %v1285 = vmul.f32 %v1061, %v1237
        %v1286 = vmul.f32 %v1063, %v1238
        %v1287 = vmul.f32 %v1065, %v1238
        %v1288 = vmul.f32 %v1067, %v1239
        %v1289 = vmul.f32 %v1069, %v1239
        %v1290 = vmul.f32 %v1071, %v1240
        %v1291 = vmul.f32 %v1073, %v1240
        %v1292 = vmul.f32 %v1075, %v1241
        %v1293 = vmul.f32 %v1077, %v1241
        %v1294 = vmul.f32 %v1079, %v1242
        %v1295 = vmul.f32 %v1081, %v1242
        %v1296 = vmul.f32 %v1083, %v1243
        %v1297 = vmul.f32 %v1085, %v1243
        %v1298 = vmul.f32 %v1087, %v1244
        %v1299 = vmul.f32 %v1089, %v1244
        %v1300 = vmul.f32 %v1091, %v1245
        %v1301 = vmul.f32 %v1093, %v1245
        %v1302 = vmul.f32 %v1095, %v1246
        %v1303 = vmul.f32 %v1097, %v1246
        %v1304 = vmul.f32 %v1099, %v1247
        %v1305 = vmul.f32 %v1101, %v1247
        %v1306 = vmul.f32 %v1103, %v1248
        %v1307 = vmul.f32 %v1105, %v1248
        %v1308 = vmul.f32 %v1107, %v1249
        %v1309 = vmul.f32 %v1109, %v1249
        %v1310 = vmul.f32 %v1111, %v1250
        %v1311 = vmul.f32 %v1113, %v1250
        %v1312 = vmul.f32 %v1115, %v1251
        %v1313 = vmul.f32 %v1117, %v1251
        %v1314 = vmul.f32 %v1119, %v1252
        %v1315 = vmul.f32 %v1121, %v1252
        %v1316 = vmul.f32 %v1123, %v1253
        %v1317 = vmul.f32 %v1125, %v1253
        %1318 = vst [vmem:[%s391] sm:$0xff] %v1254
        %1319 = vst [vmem:[%s391 + $0x8] sm:$0xff] %v1255
        %1320 = vst [vmem:[%s391 + $0x10] sm:$0xff] %v1256
        %1321 = vst [vmem:[%s391 + $0x18] sm:$0xff] %v1257
        %1322 = vst [vmem:[%s391 + $0x20] sm:$0xff] %v1258
        %1323 = vst [vmem:[%s391 + $0x28] sm:$0xff] %v1259
        %1324 = vst [vmem:[%s391 + $0x30] sm:$0xff] %v1260
        %1325 = vst [vmem:[%s391 + $0x38] sm:$0xff] %v1261
        %1326 = vst [vmem:[%s391 + $0x40] sm:$0xff] %v1262
        %1327 = vst [vmem:[%s391 + $0x48] sm:$0xff] %v1263
        %1328 = vst [vmem:[%s391 + $0x50] sm:$0xff] %v1264
        %1329 = vst [vmem:[%s391 + $0x58] sm:$0xff] %v1265
        %1330 = vst [vmem:[%s391 + $0x60] sm:$0xff] %v1266
        %1331 = vst [vmem:[%s391 + $0x68] sm:$0xff] %v1267
        %1332 = vst [vmem:[%s391 + $0x70] sm:$0xff] %v1268
        %1333 = vst [vmem:[%s391 + $0x78] sm:$0xff] %v1269
        %1334 = vst [vmem:[%s391 + $0x80] sm:$0xff] %v1270
        %1335 = vst [vmem:[%s391 + $0x88] sm:$0xff] %v1271
        %1336 = vst [vmem:[%s391 + $0x90] sm:$0xff] %v1272
        %1337 = vst [vmem:[%s391 + $0x98] sm:$0xff] %v1273
        %1338 = vst [vmem:[%s391 + $0xa0] sm:$0xff] %v1274
        %1339 = vst [vmem:[%s391 + $0xa8] sm:$0xff] %v1275
        %1340 = vst [vmem:[%s391 + $0xb0] sm:$0xff] %v1276
        %1341 = vst [vmem:[%s391 + $0xb8] sm:$0xff] %v1277
        %1342 = vst [vmem:[%s391 + $0xc0] sm:$0xff] %v1278
        %1343 = vst [vmem:[%s391 + $0xc8] sm:$0xff] %v1279
        %1344 = vst [vmem:[%s391 + $0xd0] sm:$0xff] %v1280
        %1345 = vst [vmem:[%s391 + $0xd8] sm:$0xff] %v1281
        %1346 = vst [vmem:[%s391 + $0xe0] sm:$0xff] %v1282
        %1347 = vst [vmem:[%s391 + $0xe8] sm:$0xff] %v1283
        %1348 = vst [vmem:[%s391 + $0xf0] sm:$0xff] %v1284
        %1349 = vst [vmem:[%s391 + $0xf8] sm:$0xff] %v1285
        %1350 = vst [vmem:[%s391 + $0x100] sm:$0xff] %v1286
        %1351 = vst [vmem:[%s391 + $0x108] sm:$0xff] %v1287
        %1352 = vst [vmem:[%s391 + $0x110] sm:$0xff] %v1288
        %1353 = vst [vmem:[%s391 + $0x118] sm:$0xff] %v1289
        %1354 = vst [vmem:[%s391 + $0x120] sm:$0xff] %v1290
        %1355 = vst [vmem:[%s391 + $0x128] sm:$0xff] %v1291
        %1356 = vst [vmem:[%s391 + $0x130] sm:$0xff] %v1292
        %1357 = vst [vmem:[%s391 + $0x138] sm:$0xff] %v1293
        %1358 = vst [vmem:[%s391 + $0x140] sm:$0xff] %v1294
        %1359 = vst [vmem:[%s391 + $0x148] sm:$0xff] %v1295
        %1360 = vst [vmem:[%s391 + $0x150] sm:$0xff] %v1296
        %1361 = vst [vmem:[%s391 + $0x158] sm:$0xff] %v1297
        %1362 = vst [vmem:[%s391 + $0x160] sm:$0xff] %v1298
        %1363 = vst [vmem:[%s391 + $0x168] sm:$0xff] %v1299
        %1364 = vst [vmem:[%s391 + $0x170] sm:$0xff] %v1300
        %1365 = vst [vmem:[%s391 + $0x178] sm:$0xff] %v1301
        %1366 = vst [vmem:[%s391 + $0x180] sm:$0xff] %v1302
        %1367 = vst [vmem:[%s391 + $0x188] sm:$0xff] %v1303
        %1368 = vst [vmem:[%s391 + $0x190] sm:$0xff] %v1304
        %1369 = vst [vmem:[%s391 + $0x198] sm:$0xff] %v1305
        %1370 = vst [vmem:[%s391 + $0x1a0] sm:$0xff] %v1306
        %1371 = vst [vmem:[%s391 + $0x1a8] sm:$0xff] %v1307
        %1372 = vst [vmem:[%s391 + $0x1b0] sm:$0xff] %v1308
        %1373 = vst [vmem:[%s391 + $0x1b8] sm:$0xff] %v1309
        %1374 = vst [vmem:[%s391 + $0x1c0] sm:$0xff] %v1310
        %1375 = vst [vmem:[%s391 + $0x1c8] sm:$0xff] %v1311
        %1376 = vst [vmem:[%s391 + $0x1d0] sm:$0xff] %v1312
        %1377 = vst [vmem:[%s391 + $0x1d8] sm:$0xff] %v1313
        %1378 = vst [vmem:[%s391 + $0x1e0] sm:$0xff] %v1314
        %1379 = vst [vmem:[%s391 + $0x1e8] sm:$0xff] %v1315
        %1380 = vst [vmem:[%s391 + $0x1f0] sm:$0xff] %v1316
        %1381 = vst [vmem:[%s391 + $0x1f8] sm:$0xff] %v1317
        %v1382 = vld [vmem:[%s344] sm:$0xff]
        %v1383 = vld [vmem:[%s344 + $0x8] sm:$0xff]
        %v1384 = vld [vmem:[%s344 + $0x10] sm:$0xff]
        %v1385 = vld [vmem:[%s344 + $0x18] sm:$0xff]
        %1386 = vmatprep.subr.mxu0 %v1255
        %1387 = vmatpush1.xpose.msra.mxu0 %v1254
        %1388 = vmatprep.subr.mxu0 %v1257
        %1389 = vmatpush1.xpose.msra.mxu0 %v1256
        %1390 = vmatprep.subr.mxu0 %v1259
        %1391 = vmatpush1.xpose.msra.mxu0 %v1258
        %1392 = vmatprep.subr.mxu0 %v1261
        %1393 = vmatpush1.xpose.msra.mxu0 %v1260
        %1394 = vmatprep.subr.mxu0 %v1263
        %1395 = vmatpush1.xpose.msra.mxu0 %v1262
        %1396 = vmatprep.subr.mxu0 %v1265
        %1397 = vmatpush1.xpose.msra.mxu0 %v1264
        %1398 = vmatprep.subr.mxu0 %v1267
        %1399 = vmatpush1.xpose.msra.mxu0 %v1266
        %1400 = vmatprep.subr.mxu0 %v1269
        %1401 = vmatpush1.xpose.msra.mxu0 %v1268
        %1402 = vmatprep.subr.mxu0 %v1271
        %1403 = vmatpush1.xpose.msra.mxu0 %v1270
        %1404 = vmatprep.subr.mxu0 %v1273
        %1405 = vmatpush1.xpose.msra.mxu0 %v1272
        %1406 = vmatprep.subr.mxu0 %v1275
        %1407 = vmatpush1.xpose.msra.mxu0 %v1274
        %1408 = vmatprep.subr.mxu0 %v1277
        %1409 = vmatpush1.xpose.msra.mxu0 %v1276
        %1410 = vmatprep.subr.mxu0 %v1279
        %1411 = vmatpush1.xpose.msra.mxu0 %v1278
        %1412 = vmatprep.subr.mxu0 %v1281
        %1413 = vmatpush1.xpose.msra.mxu0 %v1280
        %1414 = vmatprep.subr.mxu0 %v1283
        %1415 = vmatpush1.xpose.msra.mxu0 %v1282
        %1416 = vmatprep.subr.mxu0 %v1285
        %1417 = vmatpush1.xpose.msra.mxu0 %v1284
        %1418 = vmatprep.subr.mxu0 %v1287
        %1419 = vmatpush1.xpose.msra.mxu0 %v1286
        %1420 = vmatprep.subr.mxu0 %v1289
        %1421 = vmatpush1.xpose.msra.mxu0 %v1288
        %1422 = vmatprep.subr.mxu0 %v1291
        %1423 = vmatpush1.xpose.msra.mxu0 %v1290
        %1424 = vmatprep.subr.mxu0 %v1293
        %1425 = vmatpush1.xpose.msra.mxu0 %v1292
        %1426 = vmatprep.subr.mxu0 %v1295
        %1427 = vmatpush1.xpose.msra.mxu0 %v1294
        %1428 = vmatprep.subr.mxu0 %v1297
        %1429 = vmatpush1.xpose.msra.mxu0 %v1296
        %1430 = vmatprep.subr.mxu0 %v1299
        %1431 = vmatpush1.xpose.msra.mxu0 %v1298
        %1432 = vmatprep.subr.mxu0 %v1301
        %1433 = vmatpush1.xpose.msra.mxu0 %v1300
        %1434 = vmatprep.subr.mxu0 %v1303
        %1435 = vmatpush1.xpose.msra.mxu0 %v1302
        %1436 = vmatprep.subr.mxu0 %v1305
        %1437 = vmatpush1.xpose.msra.mxu0 %v1304
        %1438 = vmatprep.subr.mxu0 %v1307
        %1439 = vmatpush1.xpose.msra.mxu0 %v1306
        %1440 = vmatprep.subr.mxu0 %v1309
        %1441 = vmatpush1.xpose.msra.mxu0 %v1308
        %1442 = vmatprep.subr.mxu0 %v1311
        %1443 = vmatpush1.xpose.msra.mxu0 %v1310
        %1444 = vmatprep.subr.mxu0 %v1313
        %1445 = vmatpush1.xpose.msra.mxu0 %v1312
        %1446 = vmatprep.subr.mxu0 %v1315
        %1447 = vmatpush1.xpose.msra.mxu0 %v1314
        %1448 = vmatprep.subr.mxu0 %v1317
        %1449 = vmatpush1.xpose.msra.mxu0 %v1316
        %1450 = vmatprep.mubr.f32.mxu0 %v1383
        %1451 = vmatmul.mubr.f32.gmra.mrb[0].mxu0 %v1382
        %v1452 = vpop.f32.mrb[0].mxu0
        %v1453 = vadd.f32 0.0, %v1452
        %v1454 = vpop.f32.mrb[0].mxu0
        %v1455 = vadd.f32 0.0, %v1454
        %1456 = vmatprep.mubr.f32.mxu0 %v1385
        %1457 = vmatmul.mubr.f32.gmra.mrb[0].mxu0 %v1384
        %v1458 = vpop.f32.mrb[0].mxu0
        %v1459 = vadd.f32 0.0, %v1458
        %v1460 = vpop.f32.mrb[0].mxu0
        %v1461 = vadd.f32 0.0, %v1460
        %1462 = vdwg.mxu0
        %v1463 = vstv %s399
        %v1464 = vmul.f32 %v1463, %v1453
        %v1465 = vmul.f32 %v1463, %v1455
        %v1466 = vmul.f32 %v1463, %v1459
        %v1467 = vmul.f32 %v1463, %v1461
        %v1468 = vadd.f32 %v1464, %v400
        %v1469 = vadd.f32 %v1465, %v401
        %v1470 = vadd.f32 %v1466, %v402
        %v1471 = vadd.f32 %v1467, %v403
        %1472 = vst [vmem:[%s384] sm:$0xff] %v1468
        %1473 = vst [vmem:[%s384 + $0x8] sm:$0xff] %v1469
        %1474 = vst [vmem:[%s384 + $0x10] sm:$0xff] %v1470
        %1475 = vst [vmem:[%s384 + $0x18] sm:$0xff] %v1471
        %s1476 = sand.u32 %s180, 1
        %s1477 = scalar_lea.sflag [#allocation5], %s1476
        %s1478 = sand.u32 %s180, 1
        %s1479 = smul.addr %s1478, 32
        %s1480 = scalar_lea.vmem [#allocation9], %s1479
        %s1481 = sand.u32 %s208, 1
        %s1482 = scalar_lea.sflag [#allocation11], %s1481
        %s1483 = sand.u32 %s208, 1
        %s1484 = smul.addr %s1483, 512
        %s1485 = scalar_lea.vmem [#allocation10], %s1484
        // Predicated region
        $region53: #{tpu_custom_call.1} parent=39 // pred_check
          %p1486 = pneg %p190
        $region54: #{tpu_custom_call.1} parent=39 // pred_check_branch
          %1488 = sbr.rel (%p1486) target = $region56
        $region55: #{tpu_custom_call.1} parent=39 // pred_region
          %s1489 = smul.u32 2, %s36
          %s1491 = ssub.s32 512, 512
          %1492 = vsyncadd %s1477, %s1491
          %s1493 = smul.addr %s35, 4
          %s1494 = sadd.s32 %s1489, %s1493
          %s1495 = smul.addr %s1494, 128
          %s1496 = scalar_lea.hbm %s5, %s1495
          %s1497 = sshll.u32 %s1480, 4
          %s1498 = int_to_ptr.vmem [resolvable:$true] %s1497
          %1503 = dma.vmem_to_hbm [thread:$0]  %s1498, 512, %s1496, %s1477, 256, 256, 16
        $region56: #{tpu_custom_call.1} parent=39 // pred_fallthru
          _
        // Predicated region
        $region57: #{tpu_custom_call.1} parent=39 // pred_check
          %p1504 = pneg %p218
        $region58: #{tpu_custom_call.1} parent=39 // pred_check_branch
          %1506 = sbr.rel (%p1504) target = $region60
        $region59: #{tpu_custom_call.1} parent=39 // pred_region
          %s1507 = smul.u32 32, %s36
          %s1509 = ssub.s32 8192, 8192
          %1510 = vsyncadd %s1482, %s1509
          %s1511 = smul.addr %s1507, 2
          %s1512 = smul.addr %s35, 64
          %s1513 = sadd.s32 %s1511, %s1512
          %s1514 = smul.addr %s1513, 128
          %s1515 = scalar_lea.hbm %s6, %s1514
          %s1516 = sshll.u32 %s1485, 4
          %s1517 = int_to_ptr.vmem [resolvable:$true] %s1516
          %1522 = dma.vmem_to_hbm [thread:$0]  %s1517, 8192, %s1515, %s1482, 256, 256, 16
        $region60: #{tpu_custom_call.1} parent=39 // pred_fallthru
          _
      $region40: #{tpu_custom_call.1} parent=5 // pred_fallthru
        _
      %p1523 = scmp.le.s32.totalorder 2, %s26
      // Predicated region
      $region61: #{tpu_custom_call.1} parent=5 // pred_check
        %p1524 = pneg %p1523
      $region62: #{tpu_custom_call.1} parent=5 // pred_check_branch
        %1526 = sbr.rel (%p1524) target = $region64
      $region63: #{tpu_custom_call.1} parent=5 // pred_region
        %s1527 = ssub.s32 %s26, 2
        // Predicated region
        $region65: #{tpu_custom_call.1} parent=63 // pred_check
          %p1528 = pneg %p196
        $region66: #{tpu_custom_call.1} parent=63 // pred_check_branch
          %1530 = sbr.rel (%p1528) target = $region68
        $region67: #{tpu_custom_call.1} parent=63 // pred_region
          %s1531 = sand.u32 %s181, 1
          %s1532 = scalar_lea.sflag [#allocation5], %s1531
          %s1533 = sand.u32 %s181, 1
          %s1534 = smul.addr %s1533, 32
          %s1535 = scalar_lea.vmem [#allocation9], %s1534
          %1536 = dma.done %s1532, 512
        $region68: #{tpu_custom_call.1} parent=63 // pred_fallthru
          _
        // Predicated region
        $region69: #{tpu_custom_call.1} parent=63 // pred_check
          %p1537 = pneg %p224
        $region70: #{tpu_custom_call.1} parent=63 // pred_check_branch
          %1539 = sbr.rel (%p1537) target = $region72
        $region71: #{tpu_custom_call.1} parent=63 // pred_region
          %s1540 = sand.u32 %s209, 1
          %s1541 = scalar_lea.sflag [#allocation11], %s1540
          %s1542 = sand.u32 %s209, 1
          %s1543 = smul.addr %s1542, 512
          %s1544 = scalar_lea.vmem [#allocation10], %s1543
          %1545 = dma.done %s1541, 8192
        $region72: #{tpu_custom_call.1} parent=63 // pred_fallthru
          _
      $region64: #{tpu_custom_call.1} parent=5 // pred_fallthru
        _
    $region6: #{tpu_custom_call.1} parent=1 // loop_footer
      %s30 = sadd.s32 1, %s26
    $region7: #{tpu_custom_call.1} parent=1 // loop_footer_branch
      %25 = sbr.rel target = $region3
    $region8: #{tpu_custom_call.1} parent=1 // loop_exit
      _
    %1546 = vsyncpa [#allocation4], 1
    %s1547 = scalar_lea.sflag [#allocation4], 1
    %1548 = vsyncpa %s1547, 1
    %1549 = vsyncpa [#allocation7], 1
    %s1550 = scalar_lea.sflag [#allocation7], 1
    %1551 = vsyncpa %s1550, 1
    %1552 = vsyncpa [#allocation5], 1
    %s1553 = scalar_lea.sflag [#allocation5], 1
    %1554 = vsyncpa %s1553, 1
    %1555 = vsyncpa [#allocation11], 1
    %s1556 = scalar_lea.sflag [#allocation11], 1
    %1557 = vsyncpa %s1556, 1

</llo_original>
